<compile_context>
chip_gen: v5e
topology: v5e:2x2
jax: 0.10.0
libtpu: 0.0.40
codegen_flags: <defaults>
</compile_context>

<pallas_src>
import math
from functools import partial

import jax
import jax.numpy as jnp
from jax import lax
from jax.experimental import pallas as pl
from jax.experimental.pallas import tpu as pltpu

MATMUL_DTYPE = jnp.bfloat16  # matmul-input dtype; accumulation stays f32


# --------------------------------------------------------------------------
# Small helpers
# --------------------------------------------------------------------------
def _softmax_last(x):
    m = jnp.max(x, axis=-1, keepdims=True)
    e = jnp.exp(x - m)
    return e * pl.reciprocal(jnp.sum(e, axis=-1, keepdims=True), approx=True)


def _softplus(x):
    # numerically stable softplus
    return jnp.maximum(x, 0.0) + jnp.log(1.0 + jnp.exp(-jnp.abs(x)))


def _cumsum_last(x):
    """Inclusive cumulative sum along the last axis via Hillis-Steele doubling.

    Uses only static slices / concatenates / adds (all Mosaic-lowerable) and is
    O(seq^2 log seq) VPU/XLU work - replaces the O(seq^3) triangular matmul.
    """
    n = x.shape[-1]
    d = 1
    while d < n:
        pad = jnp.zeros(x.shape[:-1] + (d,), x.dtype)
        x = x + jnp.concatenate([pad, x[..., : n - d]], axis=-1)
        d *= 2
    return x


def _tile_q(seq, cap=256):
    """Largest convenient query-row tile (multiple of 8) dividing seq, capped."""
    if seq <= cap:
        return seq
    for t in (cap, 128, 64, 32, 16, 8):
        if seq % t == 0:
            return t
    return seq  # fallback: single row block


# --------------------------------------------------------------------------
# Fused layer kernel: one grid step = one (batch, query-row-tile)
#   qkv projections + forgetting attention + out_proj + residual + LN1
#   + FFN(ReLU) + residual + LN2
# --------------------------------------------------------------------------
def _layer_kernel(*refs, n_heads, d_k, zero_pad, apply_pos, kq_same):
    if kq_same:
        (res_ref, key_ref, val_ref, sim_ref, dec_ref, mask_ref,
         wk_ref, wv_ref, bk_ref, bv_ref,
         wo_ref, bo_ref, g1_ref, be1_ref,
         w1_ref, b1_ref, w2_ref, b2_ref, g2_ref, be2_ref,
         o_ref, k2_sc, v2_sc) = refs
        wq_ref, bq_ref = wk_ref, bk_ref
    else:
        (res_ref, key_ref, val_ref, sim_ref, dec_ref, mask_ref,
         wq_ref, wk_ref, wv_ref, bq_ref, bk_ref, bv_ref,
         wo_ref, bo_ref, g1_ref, be1_ref,
         w1_ref, b1_ref, w2_ref, b2_ref, g2_ref, be2_ref,
         o_ref, k2_sc, v2_sc) = refs

    eps = jnp.float32(1e-5)
    inv_sqrt_dk = jnp.float32(1.0 / math.sqrt(d_k))
    qi = pl.program_id(1)

    # --- K/V projections: computed once per batch (first row tile), kept in
    #     persistent bf16 VMEM scratch and reused by every row tile of that
    #     batch (qi is the innermost, "arbitrary" grid axis). ---
    @pl.when(qi == 0)
    def _():
        k2_sc[...] = (jnp.dot(key_ref[...].astype(MATMUL_DTYPE), wk_ref[...],
                              preferred_element_type=jnp.float32)
                      + bk_ref[...]).astype(MATMUL_DTYPE)
        v2_sc[...] = (jnp.dot(val_ref[...].astype(MATMUL_DTYPE), wv_ref[...],
                              preferred_element_type=jnp.float32)
                      + bv_ref[...]).astype(MATMUL_DTYPE)

    res = res_ref[...]                                   # (TQ, d_model) f32
    # Q projection for this row tile (input == residual tile, already in VMEM).
    q2 = (jnp.dot(res.astype(MATMUL_DTYPE), wq_ref[...],
                  preferred_element_type=jnp.float32)
          + bq_ref[...]).astype(MATMUL_DTYPE)            # (TQ, d_model)
    k2 = k2_sc[...]                                      # (seq, d_model) bf16
    v2 = v2_sc[...]

    # batch/row-shared terms hoisted out of the head loop
    mask = mask_ref[...]                                 # (TQ, seq) f32 {0,1}
    add_neg = jnp.where(mask == 0.0, jnp.float32(-1e32), jnp.float32(0.0))
    pos_eff = sim_ref[...]                               # position_effect
    gamma = -1.0 * _softplus(dec_ref[...])               # -softplus(difficulty)

    attn = None
    for hh in range(n_heads):
        lo = hh * d_k
        qh = q2[:, lo:lo + d_k]
        kh = k2[:, lo:lo + d_k]
        vh = v2[:, lo:lo + d_k]

        # scores = q @ k^T / sqrt(d_k)
        scores = lax.dot_general(
            qh, kh, (((1,), (1,)), ((), ())),
            preferred_element_type=jnp.float32) * inv_sqrt_dk    # (TQ, seq)

        # first masked softmax (builds the forgetting effect only)
        s_ = _softmax_last(scores + add_neg) * mask
        # (disttotal - distcum)[i, j] = sum_{j' > j} s_[i, j']
        rem = jnp.sum(s_, axis=-1, keepdims=True) - _cumsum_last(s_)
        dist = jnp.sqrt(jnp.maximum(rem * pos_eff, 0.0))
        total_effect = jnp.clip(jnp.exp(dist * gamma), 1e-5, 1e5)

        # second masked softmax; dropout: identity (eval mode)
        p = _softmax_last(scores * total_effect + add_neg)

        head_out = jnp.dot(p.astype(MATMUL_DTYPE), vh,
                           preferred_element_type=jnp.float32)   # (TQ, d_k)
        # out_proj accumulation against the matching row-slice of Wo
        part = jnp.dot(head_out.astype(MATMUL_DTYPE), wo_ref[lo:lo + d_k, :],
                       preferred_element_type=jnp.float32)       # (TQ, d_model)
        attn = part if attn is None else attn + part

    if zero_pad:
        # zero_pad only touches query row 0 of the whole sequence, i.e. row 0
        # of the first row tile.  (zero_pad is set exactly when mask_k == 0,
        # which is also the only case with a fully-masked query row.)
        row0 = lax.broadcasted_iota(jnp.int32, (attn.shape[0], 1), 0) == 0
        attn = jnp.where(jnp.logical_and(row0, qi == 0), 0.0, attn)

    # out_proj bias + residual + LayerNorm1   (dropout1: identity, eval mode)
    h1 = res + attn + bo_ref[...]
    mu = jnp.mean(h1, axis=-1, keepdims=True)
    var = jnp.mean((h1 - mu) ** 2, axis=-1, keepdims=True)
    n1 = (h1 - mu) * lax.rsqrt(var + eps) * g1_ref[...] + be1_ref[...]

    if apply_pos:
        ff = jnp.dot(n1.astype(MATMUL_DTYPE), w1_ref[...],
                     preferred_element_type=jnp.float32) + b1_ref[...]
        ff = jnp.maximum(ff, 0.0)                        # ReLU; dropout: identity
        ff2 = jnp.dot(ff.astype(MATMUL_DTYPE), w2_ref[...],
                      preferred_element_type=jnp.float32) + b2_ref[...]
        h2 = n1 + ff2                                    # dropout2: identity (eval)
        mu2 = jnp.mean(h2, axis=-1, keepdims=True)
        var2 = jnp.mean((h2 - mu2) ** 2, axis=-1, keepdims=True)
        o_ref[...] = (h2 - mu2) * lax.rsqrt(var2 + eps) * g2_ref[...] + be2_ref[...]
    else:
        o_ref[...] = n1


def transformer_layer_pallas(query, key, values, satate_sim, decay, mask2d,
                             params, zero_pad, apply_pos):
    bs, seq, d_model = query.shape
    h = params["n_heads"]
    d_k = d_model // h
    d_ff = params["W1T"].shape[1]
    kq_same = bool(params["kq_same"])
    tq = _tile_q(seq)
    n_qt = seq // tq
    r = lambda x: x.reshape(1, -1)

    kern = partial(_layer_kernel, n_heads=h, d_k=d_k, zero_pad=bool(zero_pad),
                   apply_pos=bool(apply_pos), kq_same=kq_same)

    row_spec = lambda c: pl.BlockSpec((None, tq, c), lambda b, qi: (b, qi, 0))
    batch_spec = lambda c: pl.BlockSpec((None, seq, c), lambda b, qi: (b, 0, 0))
    const_spec = lambda a, c: pl.BlockSpec((a, c), lambda b, qi: (0, 0))

    wk = params["WkT"].astype(MATMUL_DTYPE)
    wv = params["WvT"].astype(MATMUL_DTYPE)
    bk = r(params["bk"])
    bv = r(params["bv"])

    act_ins = (query, key, values, satate_sim, decay, mask2d)
    act_specs = [row_spec(d_model),        # residual / q-proj input (row tile)
                 batch_spec(d_model),      # key   (full seq, fetched once/batch)
                 batch_spec(d_model),      # values
                 row_spec(seq),            # satate_sim (row tile)
                 row_spec(seq),            # decay      (row tile)
                 pl.BlockSpec((tq, seq), lambda b, qi: (qi, 0))]   # mask

    if kq_same:
        w_ins = (wk, wv, bk, bv)
        w_specs = [const_spec(d_model, d_model)] * 2 + [const_spec(1, d_model)] * 2
    else:
        wq = params["WqT"].astype(MATMUL_DTYPE)
        bq = r(params["bq"])
        w_ins = (wq, wk, wv, bq, bk, bv)
        w_specs = [const_spec(d_model, d_model)] * 3 + [const_spec(1, d_model)] * 3

    post_ins = (params["WoT"].astype(MATMUL_DTYPE), r(params["bo"]),
                r(params["ln1_g"]), r(params["ln1_b"]),
                params["W1T"].astype(MATMUL_DTYPE), r(params["b1"]),
                params["W2T"].astype(MATMUL_DTYPE), r(params["b2"]),
                r(params["ln2_g"]), r(params["ln2_b"]))
    post_specs = [const_spec(d_model, d_model), const_spec(1, d_model),
                  const_spec(1, d_model), const_spec(1, d_model),
                  const_spec(d_model, d_ff), const_spec(1, d_ff),
                  const_spec(d_ff, d_model), const_spec(1, d_model),
                  const_spec(1, d_model), const_spec(1, d_model)]

    return pl.pallas_call(
        kern,
        out_shape=jax.ShapeDtypeStruct((bs, seq, d_model), jnp.float32),
        grid=(bs, n_qt),
        in_specs=act_specs + w_specs + post_specs,
        out_specs=row_spec(d_model),
        scratch_shapes=[pltpu.VMEM((seq, d_model), MATMUL_DTYPE),   # k2
                        pltpu.VMEM((seq, d_model), MATMUL_DTYPE)],  # v2
        compiler_params=pltpu.CompilerParams(
            # qi carries the k2/v2 scratch dependence -> must stay "arbitrary"
            dimension_semantics=("parallel", "arbitrary"),
            vmem_limit_bytes=56 * 1024 * 1024),
    )(*act_ins, *w_ins, *post_ins)


# --------------------------------------------------------------------------
# Parameter init (deterministic, shapes from the module __init__)
# --------------------------------------------------------------------------
def init_params(key, d_model, d_ff, n_heads, kq_same=True):
    ks = jax.random.split(key, 6)

    def xavier(k, fan_in, fan_out):
        bound = math.sqrt(6.0 / (fan_in + fan_out))
        # PyTorch weight layout is (out, in); we store the transpose (in, out).
        return jax.random.uniform(k, (fan_out, fan_in), jnp.float32, -bound, bound).T

    params = dict(
        n_heads=n_heads, kq_same=kq_same,
        WkT=xavier(ks[0], d_model, d_model), bk=jnp.zeros((d_model,), jnp.float32),
        WvT=xavier(ks[1], d_model, d_model), bv=jnp.zeros((d_model,), jnp.float32),
        WoT=xavier(ks[2], d_model, d_model), bo=jnp.zeros((d_model,), jnp.float32),
        W1T=xavier(ks[3], d_model, d_ff),    b1=jnp.zeros((d_ff,), jnp.float32),
        W2T=xavier(ks[4], d_ff, d_model),    b2=jnp.zeros((d_model,), jnp.float32),
        ln1_g=jnp.ones((d_model,), jnp.float32), ln1_b=jnp.zeros((d_model,), jnp.float32),
        ln2_g=jnp.ones((d_model,), jnp.float32), ln2_b=jnp.zeros((d_model,), jnp.float32),
    )
    if not kq_same:
        params["WqT"] = xavier(ks[5], d_model, d_model)
        params["bq"] = jnp.zeros((d_model,), jnp.float32)
    return params


# --------------------------------------------------------------------------
# TransformerLayer.forward equivalent
# --------------------------------------------------------------------------
def transformer_layer_forward(params, mask_k, query, key, values,
                              satate_sim, decay, apply_pos=True):
    bs, seq, d_model = query.shape

    # src_mask[i, j] = 1 where attention is allowed:
    #   nopeek = triu(ones, k=mask_k); src_mask = (nopeek == 0)  <=>  j < i + mask_k
    # NOTE: mask is shared across the batch (matches the reference construction).
    idx = jnp.arange(seq)
    src_mask = (idx[None, :] < idx[:, None] + mask_k).astype(jnp.float32)
    zero_pad = (mask_k == 0)

    return transformer_layer_pallas(query, key, values, satate_sim, decay,
                                    src_mask, params, zero_pad, apply_pos)


# --------------------------------------------------------------------------
if __name__ == "__main__":
    bs, seq, d_model, n_heads, d_ff = 2, 8, 32, 4, 64
    root = jax.random.PRNGKey(0)
    kp, kq, kk, kv, ksim, kdec = jax.random.split(root, 6)

    params = init_params(kp, d_model, d_ff, n_heads, kq_same=True)  # kq_same == 1

    query = jax.random.normal(kq, (bs, seq, d_model), jnp.float32)
    key_in = jax.random.normal(kk, (bs, seq, d_model), jnp.float32)
    values = jax.random.normal(kv, (bs, seq, d_model), jnp.float32)
    satate_sim = jax.random.uniform(ksim, (bs, seq, seq), jnp.float32)
    decay = jax.random.normal(kdec, (bs, seq, seq), jnp.float32)

    # mask == 0 branch of TransformerLayer.forward (strictly-causal mask, zero_pad=True)
    out = transformer_layer_forward(params, 0, query, key_in, values,
                                    satate_sim, decay, apply_pos=True)
    jax.block_until_ready(out)
    assert out.shape == (bs, seq, d_model)
    assert bool(jnp.all(jnp.isfinite(out)))
    print("KERNEL_OK")
</pallas_src>

<mosaic_0001>
module attributes {stable_mosaic.version = 11 : i64} {
  func.func @_layer_kernel(%arg0: i32, %arg1: i32, %arg2: memref<1x8x32xf32, #tpu.memory_space<vmem>>, %arg3: memref<1x8x32xf32, #tpu.memory_space<vmem>>, %arg4: memref<1x8x32xf32, #tpu.memory_space<vmem>>, %arg5: memref<1x8x8xf32, #tpu.memory_space<vmem>>, %arg6: memref<1x8x8xf32, #tpu.memory_space<vmem>>, %arg7: memref<8x8xf32, #tpu.memory_space<vmem>>, %arg8: memref<32x32xbf16, #tpu.memory_space<vmem>>, %arg9: memref<32x32xbf16, #tpu.memory_space<vmem>>, %arg10: memref<1x32xf32, #tpu.memory_space<vmem>>, %arg11: memref<1x32xf32, #tpu.memory_space<vmem>>, %arg12: memref<32x32xbf16, #tpu.memory_space<vmem>>, %arg13: memref<1x32xf32, #tpu.memory_space<vmem>>, %arg14: memref<1x32xf32, #tpu.memory_space<vmem>>, %arg15: memref<1x32xf32, #tpu.memory_space<vmem>>, %arg16: memref<32x64xbf16, #tpu.memory_space<vmem>>, %arg17: memref<1x64xf32, #tpu.memory_space<vmem>>, %arg18: memref<64x32xbf16, #tpu.memory_space<vmem>>, %arg19: memref<1x32xf32, #tpu.memory_space<vmem>>, %arg20: memref<1x32xf32, #tpu.memory_space<vmem>>, %arg21: memref<1x32xf32, #tpu.memory_space<vmem>>, %arg22: memref<1x8x32xf32, #tpu.memory_space<vmem>>, %arg23: memref<8x32xbf16, #tpu.memory_space<vmem>>, %arg24: memref<8x32xbf16, #tpu.memory_space<vmem>>) attributes {dimension_semantics = [#tpu.dimension_semantics<parallel>, #tpu.dimension_semantics<arbitrary>], iteration_bounds = array<i64: 2, 1>, scalar_prefetch = 0 : i64, scratch_operands = 2 : i64, tpu.core_type = #tpu.core_type<tc>, window_params = [{transform_indices = @transform_0, window_bounds = array<i64: 1, 8, 32>}, {transform_indices = @transform_1, window_bounds = array<i64: 1, 8, 32>}, {transform_indices = @transform_2, window_bounds = array<i64: 1, 8, 32>}, {transform_indices = @transform_3, window_bounds = array<i64: 1, 8, 8>}, {transform_indices = @transform_4, window_bounds = array<i64: 1, 8, 8>}, {transform_indices = @transform_5, window_bounds = array<i64: 8, 8>}, {pipeline_mode = #tpu.pipeline_mode<synchronous>, transform_indices = @transform_6, window_bounds = array<i64: 32, 32>}, {pipeline_mode = #tpu.pipeline_mode<synchronous>, transform_indices = @transform_7, window_bounds = array<i64: 32, 32>}, {pipeline_mode = #tpu.pipeline_mode<synchronous>, transform_indices = @transform_8, window_bounds = array<i64: 1, 32>}, {pipeline_mode = #tpu.pipeline_mode<synchronous>, transform_indices = @transform_9, window_bounds = array<i64: 1, 32>}, {pipeline_mode = #tpu.pipeline_mode<synchronous>, transform_indices = @transform_10, window_bounds = array<i64: 32, 32>}, {pipeline_mode = #tpu.pipeline_mode<synchronous>, transform_indices = @transform_11, window_bounds = array<i64: 1, 32>}, {pipeline_mode = #tpu.pipeline_mode<synchronous>, transform_indices = @transform_12, window_bounds = array<i64: 1, 32>}, {pipeline_mode = #tpu.pipeline_mode<synchronous>, transform_indices = @transform_13, window_bounds = array<i64: 1, 32>}, {pipeline_mode = #tpu.pipeline_mode<synchronous>, transform_indices = @transform_14, window_bounds = array<i64: 32, 64>}, {pipeline_mode = #tpu.pipeline_mode<synchronous>, transform_indices = @transform_15, window_bounds = array<i64: 1, 64>}, {pipeline_mode = #tpu.pipeline_mode<synchronous>, transform_indices = @transform_16, window_bounds = array<i64: 64, 32>}, {pipeline_mode = #tpu.pipeline_mode<synchronous>, transform_indices = @transform_17, window_bounds = array<i64: 1, 32>}, {pipeline_mode = #tpu.pipeline_mode<synchronous>, transform_indices = @transform_18, window_bounds = array<i64: 1, 32>}, {pipeline_mode = #tpu.pipeline_mode<synchronous>, transform_indices = @transform_19, window_bounds = array<i64: 1, 32>}, {transform_indices = @transform_20, window_bounds = array<i64: 1, 8, 32>}]} {
    %c0_i32 = arith.constant 0 : i32
    %0 = arith.cmpi eq, %arg1, %c0_i32 : i32
    %1 = arith.extui %0 : i1 to i32
    %c0_i32_0 = arith.constant 0 : i32
    %2 = arith.cmpi ne, %1, %c0_i32_0 : i32
    scf.if %2 {
      %c0_128 = arith.constant 0 : index
      %c0_129 = arith.constant 0 : index
      %c0_130 = arith.constant 0 : index
      %363 = vector.load %arg3[%c0_128, %c0_129, %c0_130] : memref<1x8x32xf32, #tpu.memory_space<vmem>>, vector<1x8x32xf32>
      %364 = vector.shape_cast %363 : vector<1x8x32xf32> to vector<8x32xf32>
      %365 = arith.truncf %364 : vector<8x32xf32> to vector<8x32xbf16>
      %c0_131 = arith.constant 0 : index
      %c0_132 = arith.constant 0 : index
      %366 = vector.load %arg8[%c0_131, %c0_132] : memref<32x32xbf16, #tpu.memory_space<vmem>>, vector<32x32xbf16>
      %cst_133 = arith.constant dense<0.000000e+00> : vector<8x32xf32>
      %367 = tpu.matmul %365, %366, %cst_133 {dimension_numbers = #tpu.dot_dimension_numbers<[1], [0], [0], [1], [0, 0, 1, 1], [], []>} : vector<8x32xbf16>, vector<32x32xbf16>, vector<8x32xf32> -> vector<8x32xf32>
      %c0_134 = arith.constant 0 : index
      %c0_135 = arith.constant 0 : index
      %368 = vector.load %arg10[%c0_134, %c0_135] : memref<1x32xf32, #tpu.memory_space<vmem>>, vector<1x32xf32>
      %369 = vector.broadcast %368 : vector<1x32xf32> to vector<8x32xf32>
      %370 = arith.addf %367, %369 : vector<8x32xf32>
      %371 = arith.truncf %370 : vector<8x32xf32> to vector<8x32xbf16>
      %c0_136 = arith.constant 0 : index
      %c0_137 = arith.constant 0 : index
      %372 = vector.load %arg23[%c0_136, %c0_137] : memref<8x32xbf16, #tpu.memory_space<vmem>>, vector<8x32xbf16>
      tpu.vector_store %arg23[%c0_136, %c0_137], %371 {strides = array<i32>} : memref<8x32xbf16, #tpu.memory_space<vmem>>, vector<8x32xbf16>,
      %c0_138 = arith.constant 0 : index
      %c0_139 = arith.constant 0 : index
      %c0_140 = arith.constant 0 : index
      %373 = vector.load %arg4[%c0_138, %c0_139, %c0_140] : memref<1x8x32xf32, #tpu.memory_space<vmem>>, vector<1x8x32xf32>
      %374 = vector.shape_cast %373 : vector<1x8x32xf32> to vector<8x32xf32>
      %375 = arith.truncf %374 : vector<8x32xf32> to vector<8x32xbf16>
      %c0_141 = arith.constant 0 : index
      %c0_142 = arith.constant 0 : index
      %376 = vector.load %arg9[%c0_141, %c0_142] : memref<32x32xbf16, #tpu.memory_space<vmem>>, vector<32x32xbf16>
      %cst_143 = arith.constant dense<0.000000e+00> : vector<8x32xf32>
      %377 = tpu.matmul %375, %376, %cst_143 {dimension_numbers = #tpu.dot_dimension_numbers<[1], [0], [0], [1], [0, 0, 1, 1], [], []>} : vector<8x32xbf16>, vector<32x32xbf16>, vector<8x32xf32> -> vector<8x32xf32>
      %c0_144 = arith.constant 0 : index
      %c0_145 = arith.constant 0 : index
      %378 = vector.load %arg11[%c0_144, %c0_145] : memref<1x32xf32, #tpu.memory_space<vmem>>, vector<1x32xf32>
      %379 = vector.broadcast %378 : vector<1x32xf32> to vector<8x32xf32>
      %380 = arith.addf %377, %379 : vector<8x32xf32>
      %381 = arith.truncf %380 : vector<8x32xf32> to vector<8x32xbf16>
      %c0_146 = arith.constant 0 : index
      %c0_147 = arith.constant 0 : index
      %382 = vector.load %arg24[%c0_146, %c0_147] : memref<8x32xbf16, #tpu.memory_space<vmem>>, vector<8x32xbf16>
      tpu.vector_store %arg24[%c0_146, %c0_147], %381 {strides = array<i32>} : memref<8x32xbf16, #tpu.memory_space<vmem>>, vector<8x32xbf16>,
    } else {
    }
    %c0 = arith.constant 0 : index
    %c0_1 = arith.constant 0 : index
    %c0_2 = arith.constant 0 : index
    %3 = vector.load %arg2[%c0, %c0_1, %c0_2] : memref<1x8x32xf32, #tpu.memory_space<vmem>>, vector<1x8x32xf32>
    %4 = vector.shape_cast %3 : vector<1x8x32xf32> to vector<8x32xf32>
    %5 = arith.truncf %4 : vector<8x32xf32> to vector<8x32xbf16>
    %c0_3 = arith.constant 0 : index
    %c0_4 = arith.constant 0 : index
    %6 = vector.load %arg8[%c0_3, %c0_4] : memref<32x32xbf16, #tpu.memory_space<vmem>>, vector<32x32xbf16>
    %cst = arith.constant dense<0.000000e+00> : vector<8x32xf32>
    %7 = tpu.matmul %5, %6, %cst {dimension_numbers = #tpu.dot_dimension_numbers<[1], [0], [0], [1], [0, 0, 1, 1], [], []>} : vector<8x32xbf16>, vector<32x32xbf16>, vector<8x32xf32> -> vector<8x32xf32>
    %c0_5 = arith.constant 0 : index
    %c0_6 = arith.constant 0 : index
    %8 = vector.load %arg10[%c0_5, %c0_6] : memref<1x32xf32, #tpu.memory_space<vmem>>, vector<1x32xf32>
    %9 = vector.broadcast %8 : vector<1x32xf32> to vector<8x32xf32>
    %10 = arith.addf %7, %9 : vector<8x32xf32>
    %11 = arith.truncf %10 : vector<8x32xf32> to vector<8x32xbf16>
    %c0_7 = arith.constant 0 : index
    %c0_8 = arith.constant 0 : index
    %12 = vector.load %arg23[%c0_7, %c0_8] : memref<8x32xbf16, #tpu.memory_space<vmem>>, vector<8x32xbf16>
    %c0_9 = arith.constant 0 : index
    %c0_10 = arith.constant 0 : index
    %13 = vector.load %arg24[%c0_9, %c0_10] : memref<8x32xbf16, #tpu.memory_space<vmem>>, vector<8x32xbf16>
    %c0_11 = arith.constant 0 : index
    %c0_12 = arith.constant 0 : index
    %14 = vector.load %arg7[%c0_11, %c0_12] : memref<8x8xf32, #tpu.memory_space<vmem>>, vector<8x8xf32>
    %cst_13 = arith.constant 0.000000e+00 : f32
    %15 = vector.broadcast %cst_13 : f32 to vector<8x8xf32>
    %16 = arith.cmpf oeq, %14, %15 : vector<8x8xf32>
    %cst_14 = arith.constant -1.000000e+32 : f32
    %cst_15 = arith.constant 0.000000e+00 : f32
    %17 = vector.broadcast %cst_14 : f32 to vector<8x8xf32>
    %18 = vector.broadcast %cst_15 : f32 to vector<8x8xf32>
    %19 = arith.select %16, %17, %18 : vector<8x8xi1>, vector<8x8xf32>
    %c0_16 = arith.constant 0 : index
    %c0_17 = arith.constant 0 : index
    %c0_18 = arith.constant 0 : index
    %20 = vector.load %arg5[%c0_16, %c0_17, %c0_18] : memref<1x8x8xf32, #tpu.memory_space<vmem>>, vector<1x8x8xf32>
    %21 = vector.shape_cast %20 : vector<1x8x8xf32> to vector<8x8xf32>
    %c0_19 = arith.constant 0 : index
    %c0_20 = arith.constant 0 : index
    %c0_21 = arith.constant 0 : index
    %22 = vector.load %arg6[%c0_19, %c0_20, %c0_21] : memref<1x8x8xf32, #tpu.memory_space<vmem>>, vector<1x8x8xf32>
    %23 = vector.shape_cast %22 : vector<1x8x8xf32> to vector<8x8xf32>
    %cst_22 = arith.constant 0.000000e+00 : f32
    %24 = vector.broadcast %cst_22 : f32 to vector<8x8xf32>
    %25 = arith.maximumf %23, %24 : vector<8x8xf32>
    %26 = math.absf %23 : vector<8x8xf32>
    %cst_23 = arith.constant 0.000000e+00 : f32
    %27 = vector.broadcast %cst_23 : f32 to vector<8x8xf32>
    %28 = arith.subf %27, %26 : vector<8x8xf32>
    %29 = math.exp %28 : vector<8x8xf32>
    %cst_24 = arith.constant 1.000000e+00 : f32
    %30 = vector.broadcast %cst_24 : f32 to vector<8x8xf32>
    %31 = arith.addf %30, %29 : vector<8x8xf32>
    %32 = math.log %31 : vector<8x8xf32>
    %33 = arith.addf %25, %32 : vector<8x8xf32>
    %cst_25 = arith.constant -1.000000e+00 : f32
    %34 = vector.broadcast %cst_25 : f32 to vector<8x8xf32>
    %35 = arith.mulf %34, %33 : vector<8x8xf32>
    %36 = vector.extract_strided_slice %11 {offsets = [0, 0], sizes = [8, 8], strides = [1, 1]} : vector<8x32xbf16> to vector<8x8xbf16>
    %37 = vector.extract_strided_slice %12 {offsets = [0, 0], sizes = [8, 8], strides = [1, 1]} : vector<8x32xbf16> to vector<8x8xbf16>
    %38 = vector.extract_strided_slice %13 {offsets = [0, 0], sizes = [8, 8], strides = [1, 1]} : vector<8x32xbf16> to vector<8x8xbf16>
    %cst_26 = arith.constant dense<0.000000e+00> : vector<8x8xf32>
    %39 = tpu.matmul %36, %37, %cst_26 {dimension_numbers = #tpu.dot_dimension_numbers<[1], [1], [0], [0], [0, 0, 1, 0], [], []>} : vector<8x8xbf16>, vector<8x8xbf16>, vector<8x8xf32> -> vector<8x8xf32>
    %cst_27 = arith.constant 0.353553385 : f32
    %40 = vector.broadcast %cst_27 : f32 to vector<8x8xf32>
    %41 = arith.mulf %39, %40 : vector<8x8xf32>
    %42 = arith.addf %41, %19 : vector<8x8xf32>
    %cst_28 = arith.constant dense<0xFF800000> : vector<8xf32>
    %43 = vector.multi_reduction <maximumf>, %42, %cst_28 [1] : vector<8x8xf32> to vector<8xf32>
    %44 = vector.shape_cast %43 : vector<8xf32> to vector<8x1xf32>
    %45 = vector.broadcast %44 : vector<8x1xf32> to vector<8x8xf32>
    %46 = arith.subf %42, %45 : vector<8x8xf32>
    %47 = math.exp %46 : vector<8x8xf32>
    %cst_29 = arith.constant dense<0.000000e+00> : vector<8xf32>
    %48 = vector.multi_reduction <add>, %47, %cst_29 [1] : vector<8x8xf32> to vector<8xf32>
    %49 = vector.shape_cast %48 : vector<8xf32> to vector<8x1xf32>
    %50 = tpu.reciprocal %49 {approx = true} : vector<8x1xf32> -> vector<8x1xf32>
    %51 = vector.broadcast %50 : vector<8x1xf32> to vector<8x8xf32>
    %52 = arith.mulf %47, %51 : vector<8x8xf32>
    %53 = arith.mulf %52, %14 : vector<8x8xf32>
    %cst_30 = arith.constant dense<0.000000e+00> : vector<8xf32>
    %54 = vector.multi_reduction <add>, %53, %cst_30 [1] : vector<8x8xf32> to vector<8xf32>
    %55 = vector.shape_cast %54 : vector<8xf32> to vector<8x1xf32>
    %cst_31 = arith.constant 0.000000e+00 : f32
    %56 = vector.broadcast %cst_31 : f32 to vector<8x1xf32>
    %57 = vector.extract_strided_slice %53 {offsets = [0, 0], sizes = [8, 7], strides = [1, 1]} : vector<8x8xf32> to vector<8x7xf32>
    %58 = tpu.concatenate %56, %57 in 1 : vector<8x1xf32>, vector<8x7xf32> -> vector<8x8xf32>
    %59 = arith.addf %53, %58 : vector<8x8xf32>
    %cst_32 = arith.constant 0.000000e+00 : f32
    %60 = vector.broadcast %cst_32 : f32 to vector<8x2xf32>
    %61 = vector.extract_strided_slice %59 {offsets = [0, 0], sizes = [8, 6], strides = [1, 1]} : vector<8x8xf32> to vector<8x6xf32>
    %62 = tpu.concatenate %60, %61 in 1 : vector<8x2xf32>, vector<8x6xf32> -> vector<8x8xf32>
    %63 = arith.addf %59, %62 : vector<8x8xf32>
    %cst_33 = arith.constant 0.000000e+00 : f32
    %64 = vector.broadcast %cst_33 : f32 to vector<8x4xf32>
    %65 = vector.extract_strided_slice %63 {offsets = [0, 0], sizes = [8, 4], strides = [1, 1]} : vector<8x8xf32> to vector<8x4xf32>
    %66 = tpu.concatenate %64, %65 in 1 : vector<8x4xf32>, vector<8x4xf32> -> vector<8x8xf32>
    %67 = arith.addf %63, %66 : vector<8x8xf32>
    %68 = vector.broadcast %55 : vector<8x1xf32> to vector<8x8xf32>
    %69 = arith.subf %68, %67 : vector<8x8xf32>
    %70 = arith.mulf %69, %21 : vector<8x8xf32>
    %cst_34 = arith.constant 0.000000e+00 : f32
    %71 = vector.broadcast %cst_34 : f32 to vector<8x8xf32>
    %72 = arith.maximumf %70, %71 : vector<8x8xf32>
    %73 = math.sqrt %72 : vector<8x8xf32>
    %74 = arith.mulf %73, %35 : vector<8x8xf32>
    %75 = math.exp %74 : vector<8x8xf32>
    %cst_35 = arith.constant 9.99999974E-6 : f32
    %cst_36 = arith.constant 1.000000e+05 : f32
    %76 = vector.broadcast %cst_35 : f32 to vector<8x8xf32>
    %77 = arith.maximumf %76, %75 : vector<8x8xf32>
    %78 = vector.broadcast %cst_36 : f32 to vector<8x8xf32>
    %79 = arith.minimumf %78, %77 : vector<8x8xf32>
    %80 = arith.mulf %41, %79 : vector<8x8xf32>
    %81 = arith.addf %80, %19 : vector<8x8xf32>
    %cst_37 = arith.constant dense<0xFF800000> : vector<8xf32>
    %82 = vector.multi_reduction <maximumf>, %81, %cst_37 [1] : vector<8x8xf32> to vector<8xf32>
    %83 = vector.shape_cast %82 : vector<8xf32> to vector<8x1xf32>
    %84 = vector.broadcast %83 : vector<8x1xf32> to vector<8x8xf32>
    %85 = arith.subf %81, %84 : vector<8x8xf32>
    %86 = math.exp %85 : vector<8x8xf32>
    %cst_38 = arith.constant dense<0.000000e+00> : vector<8xf32>
    %87 = vector.multi_reduction <add>, %86, %cst_38 [1] : vector<8x8xf32> to vector<8xf32>
    %88 = vector.shape_cast %87 : vector<8xf32> to vector<8x1xf32>
    %89 = tpu.reciprocal %88 {approx = true} : vector<8x1xf32> -> vector<8x1xf32>
    %90 = vector.broadcast %89 : vector<8x1xf32> to vector<8x8xf32>
    %91 = arith.mulf %86, %90 : vector<8x8xf32>
    %92 = arith.truncf %91 : vector<8x8xf32> to vector<8x8xbf16>
    %cst_39 = arith.constant dense<0.000000e+00> : vector<8x8xf32>
    %93 = tpu.matmul %92, %38, %cst_39 {dimension_numbers = #tpu.dot_dimension_numbers<[1], [0], [0], [1], [0, 0, 1, 1], [], []>} : vector<8x8xbf16>, vector<8x8xbf16>, vector<8x8xf32> -> vector<8x8xf32>
    %94 = arith.truncf %93 : vector<8x8xf32> to vector<8x8xbf16>
    %c0_40 = arith.constant 0 : index
    %c0_41 = arith.constant 0 : index
    %95 = vector.load %arg12[%c0_40, %c0_41] : memref<32x32xbf16, #tpu.memory_space<vmem>>, vector<8x32xbf16>
    %cst_42 = arith.constant dense<0.000000e+00> : vector<8x32xf32>
    %96 = tpu.matmul %94, %95, %cst_42 {dimension_numbers = #tpu.dot_dimension_numbers<[1], [0], [0], [1], [0, 0, 1, 1], [], []>} : vector<8x8xbf16>, vector<8x32xbf16>, vector<8x32xf32> -> vector<8x32xf32>
    %97 = vector.extract_strided_slice %11 {offsets = [0, 8], sizes = [8, 8], strides = [1, 1]} : vector<8x32xbf16> to vector<8x8xbf16>
    %98 = vector.extract_strided_slice %12 {offsets = [0, 8], sizes = [8, 8], strides = [1, 1]} : vector<8x32xbf16> to vector<8x8xbf16>
    %99 = vector.extract_strided_slice %13 {offsets = [0, 8], sizes = [8, 8], strides = [1, 1]} : vector<8x32xbf16> to vector<8x8xbf16>
    %cst_43 = arith.constant dense<0.000000e+00> : vector<8x8xf32>
    %100 = tpu.matmul %97, %98, %cst_43 {dimension_numbers = #tpu.dot_dimension_numbers<[1], [1], [0], [0], [0, 0, 1, 0], [], []>} : vector<8x8xbf16>, vector<8x8xbf16>, vector<8x8xf32> -> vector<8x8xf32>
    %cst_44 = arith.constant 0.353553385 : f32
    %101 = vector.broadcast %cst_44 : f32 to vector<8x8xf32>
    %102 = arith.mulf %100, %101 : vector<8x8xf32>
    %103 = arith.addf %102, %19 : vector<8x8xf32>
    %cst_45 = arith.constant dense<0xFF800000> : vector<8xf32>
    %104 = vector.multi_reduction <maximumf>, %103, %cst_45 [1] : vector<8x8xf32> to vector<8xf32>
    %105 = vector.shape_cast %104 : vector<8xf32> to vector<8x1xf32>
    %106 = vector.broadcast %105 : vector<8x1xf32> to vector<8x8xf32>
    %107 = arith.subf %103, %106 : vector<8x8xf32>
    %108 = math.exp %107 : vector<8x8xf32>
    %cst_46 = arith.constant dense<0.000000e+00> : vector<8xf32>
    %109 = vector.multi_reduction <add>, %108, %cst_46 [1] : vector<8x8xf32> to vector<8xf32>
    %110 = vector.shape_cast %109 : vector<8xf32> to vector<8x1xf32>
    %111 = tpu.reciprocal %110 {approx = true} : vector<8x1xf32> -> vector<8x1xf32>
    %112 = vector.broadcast %111 : vector<8x1xf32> to vector<8x8xf32>
    %113 = arith.mulf %108, %112 : vector<8x8xf32>
    %114 = arith.mulf %113, %14 : vector<8x8xf32>
    %cst_47 = arith.constant dense<0.000000e+00> : vector<8xf32>
    %115 = vector.multi_reduction <add>, %114, %cst_47 [1] : vector<8x8xf32> to vector<8xf32>
    %116 = vector.shape_cast %115 : vector<8xf32> to vector<8x1xf32>
    %cst_48 = arith.constant 0.000000e+00 : f32
    %117 = vector.broadcast %cst_48 : f32 to vector<8x1xf32>
    %118 = vector.extract_strided_slice %114 {offsets = [0, 0], sizes = [8, 7], strides = [1, 1]} : vector<8x8xf32> to vector<8x7xf32>
    %119 = tpu.concatenate %117, %118 in 1 : vector<8x1xf32>, vector<8x7xf32> -> vector<8x8xf32>
    %120 = arith.addf %114, %119 : vector<8x8xf32>
    %cst_49 = arith.constant 0.000000e+00 : f32
    %121 = vector.broadcast %cst_49 : f32 to vector<8x2xf32>
    %122 = vector.extract_strided_slice %120 {offsets = [0, 0], sizes = [8, 6], strides = [1, 1]} : vector<8x8xf32> to vector<8x6xf32>
    %123 = tpu.concatenate %121, %122 in 1 : vector<8x2xf32>, vector<8x6xf32> -> vector<8x8xf32>
    %124 = arith.addf %120, %123 : vector<8x8xf32>
    %cst_50 = arith.constant 0.000000e+00 : f32
    %125 = vector.broadcast %cst_50 : f32 to vector<8x4xf32>
    %126 = vector.extract_strided_slice %124 {offsets = [0, 0], sizes = [8, 4], strides = [1, 1]} : vector<8x8xf32> to vector<8x4xf32>
    %127 = tpu.concatenate %125, %126 in 1 : vector<8x4xf32>, vector<8x4xf32> -> vector<8x8xf32>
    %128 = arith.addf %124, %127 : vector<8x8xf32>
    %129 = vector.broadcast %116 : vector<8x1xf32> to vector<8x8xf32>
    %130 = arith.subf %129, %128 : vector<8x8xf32>
    %131 = arith.mulf %130, %21 : vector<8x8xf32>
    %cst_51 = arith.constant 0.000000e+00 : f32
    %132 = vector.broadcast %cst_51 : f32 to vector<8x8xf32>
    %133 = arith.maximumf %131, %132 : vector<8x8xf32>
    %134 = math.sqrt %133 : vector<8x8xf32>
    %135 = arith.mulf %134, %35 : vector<8x8xf32>
    %136 = math.exp %135 : vector<8x8xf32>
    %cst_52 = arith.constant 9.99999974E-6 : f32
    %cst_53 = arith.constant 1.000000e+05 : f32
    %137 = vector.broadcast %cst_52 : f32 to vector<8x8xf32>
    %138 = arith.maximumf %137, %136 : vector<8x8xf32>
    %139 = vector.broadcast %cst_53 : f32 to vector<8x8xf32>
    %140 = arith.minimumf %139, %138 : vector<8x8xf32>
    %141 = arith.mulf %102, %140 : vector<8x8xf32>
    %142 = arith.addf %141, %19 : vector<8x8xf32>
    %cst_54 = arith.constant dense<0xFF800000> : vector<8xf32>
    %143 = vector.multi_reduction <maximumf>, %142, %cst_54 [1] : vector<8x8xf32> to vector<8xf32>
    %144 = vector.shape_cast %143 : vector<8xf32> to vector<8x1xf32>
    %145 = vector.broadcast %144 : vector<8x1xf32> to vector<8x8xf32>
    %146 = arith.subf %142, %145 : vector<8x8xf32>
    %147 = math.exp %146 : vector<8x8xf32>
    %cst_55 = arith.constant dense<0.000000e+00> : vector<8xf32>
    %148 = vector.multi_reduction <add>, %147, %cst_55 [1] : vector<8x8xf32> to vector<8xf32>
    %149 = vector.shape_cast %148 : vector<8xf32> to vector<8x1xf32>
    %150 = tpu.reciprocal %149 {approx = true} : vector<8x1xf32> -> vector<8x1xf32>
    %151 = vector.broadcast %150 : vector<8x1xf32> to vector<8x8xf32>
    %152 = arith.mulf %147, %151 : vector<8x8xf32>
    %153 = arith.truncf %152 : vector<8x8xf32> to vector<8x8xbf16>
    %cst_56 = arith.constant dense<0.000000e+00> : vector<8x8xf32>
    %154 = tpu.matmul %153, %99, %cst_56 {dimension_numbers = #tpu.dot_dimension_numbers<[1], [0], [0], [1], [0, 0, 1, 1], [], []>} : vector<8x8xbf16>, vector<8x8xbf16>, vector<8x8xf32> -> vector<8x8xf32>
    %155 = arith.truncf %154 : vector<8x8xf32> to vector<8x8xbf16>
    %c8 = arith.constant 8 : index
    %c0_57 = arith.constant 0 : index
    %156 = vector.load %arg12[%c8, %c0_57] : memref<32x32xbf16, #tpu.memory_space<vmem>>, vector<8x32xbf16>
    %cst_58 = arith.constant dense<0.000000e+00> : vector<8x32xf32>
    %157 = tpu.matmul %155, %156, %cst_58 {dimension_numbers = #tpu.dot_dimension_numbers<[1], [0], [0], [1], [0, 0, 1, 1], [], []>} : vector<8x8xbf16>, vector<8x32xbf16>, vector<8x32xf32> -> vector<8x32xf32>
    %158 = arith.addf %96, %157 : vector<8x32xf32>
    %159 = vector.extract_strided_slice %11 {offsets = [0, 16], sizes = [8, 8], strides = [1, 1]} : vector<8x32xbf16> to vector<8x8xbf16>
    %160 = vector.extract_strided_slice %12 {offsets = [0, 16], sizes = [8, 8], strides = [1, 1]} : vector<8x32xbf16> to vector<8x8xbf16>
    %161 = vector.extract_strided_slice %13 {offsets = [0, 16], sizes = [8, 8], strides = [1, 1]} : vector<8x32xbf16> to vector<8x8xbf16>
    %cst_59 = arith.constant dense<0.000000e+00> : vector<8x8xf32>
    %162 = tpu.matmul %159, %160, %cst_59 {dimension_numbers = #tpu.dot_dimension_numbers<[1], [1], [0], [0], [0, 0, 1, 0], [], []>} : vector<8x8xbf16>, vector<8x8xbf16>, vector<8x8xf32> -> vector<8x8xf32>
    %cst_60 = arith.constant 0.353553385 : f32
    %163 = vector.broadcast %cst_60 : f32 to vector<8x8xf32>
    %164 = arith.mulf %162, %163 : vector<8x8xf32>
    %165 = arith.addf %164, %19 : vector<8x8xf32>
    %cst_61 = arith.constant dense<0xFF800000> : vector<8xf32>
    %166 = vector.multi_reduction <maximumf>, %165, %cst_61 [1] : vector<8x8xf32> to vector<8xf32>
    %167 = vector.shape_cast %166 : vector<8xf32> to vector<8x1xf32>
    %168 = vector.broadcast %167 : vector<8x1xf32> to vector<8x8xf32>
    %169 = arith.subf %165, %168 : vector<8x8xf32>
    %170 = math.exp %169 : vector<8x8xf32>
    %cst_62 = arith.constant dense<0.000000e+00> : vector<8xf32>
    %171 = vector.multi_reduction <add>, %170, %cst_62 [1] : vector<8x8xf32> to vector<8xf32>
    %172 = vector.shape_cast %171 : vector<8xf32> to vector<8x1xf32>
    %173 = tpu.reciprocal %172 {approx = true} : vector<8x1xf32> -> vector<8x1xf32>
    %174 = vector.broadcast %173 : vector<8x1xf32> to vector<8x8xf32>
    %175 = arith.mulf %170, %174 : vector<8x8xf32>
    %176 = arith.mulf %175, %14 : vector<8x8xf32>
    %cst_63 = arith.constant dense<0.000000e+00> : vector<8xf32>
    %177 = vector.multi_reduction <add>, %176, %cst_63 [1] : vector<8x8xf32> to vector<8xf32>
    %178 = vector.shape_cast %177 : vector<8xf32> to vector<8x1xf32>
    %cst_64 = arith.constant 0.000000e+00 : f32
    %179 = vector.broadcast %cst_64 : f32 to vector<8x1xf32>
    %180 = vector.extract_strided_slice %176 {offsets = [0, 0], sizes = [8, 7], strides = [1, 1]} : vector<8x8xf32> to vector<8x7xf32>
    %181 = tpu.concatenate %179, %180 in 1 : vector<8x1xf32>, vector<8x7xf32> -> vector<8x8xf32>
    %182 = arith.addf %176, %181 : vector<8x8xf32>
    %cst_65 = arith.constant 0.000000e+00 : f32
    %183 = vector.broadcast %cst_65 : f32 to vector<8x2xf32>
    %184 = vector.extract_strided_slice %182 {offsets = [0, 0], sizes = [8, 6], strides = [1, 1]} : vector<8x8xf32> to vector<8x6xf32>
    %185 = tpu.concatenate %183, %184 in 1 : vector<8x2xf32>, vector<8x6xf32> -> vector<8x8xf32>
    %186 = arith.addf %182, %185 : vector<8x8xf32>
    %cst_66 = arith.constant 0.000000e+00 : f32
    %187 = vector.broadcast %cst_66 : f32 to vector<8x4xf32>
    %188 = vector.extract_strided_slice %186 {offsets = [0, 0], sizes = [8, 4], strides = [1, 1]} : vector<8x8xf32> to vector<8x4xf32>
    %189 = tpu.concatenate %187, %188 in 1 : vector<8x4xf32>, vector<8x4xf32> -> vector<8x8xf32>
    %190 = arith.addf %186, %189 : vector<8x8xf32>
    %191 = vector.broadcast %178 : vector<8x1xf32> to vector<8x8xf32>
    %192 = arith.subf %191, %190 : vector<8x8xf32>
    %193 = arith.mulf %192, %21 : vector<8x8xf32>
    %cst_67 = arith.constant 0.000000e+00 : f32
    %194 = vector.broadcast %cst_67 : f32 to vector<8x8xf32>
    %195 = arith.maximumf %193, %194 : vector<8x8xf32>
    %196 = math.sqrt %195 : vector<8x8xf32>
    %197 = arith.mulf %196, %35 : vector<8x8xf32>
    %198 = math.exp %197 : vector<8x8xf32>
    %cst_68 = arith.constant 9.99999974E-6 : f32
    %cst_69 = arith.constant 1.000000e+05 : f32
    %199 = vector.broadcast %cst_68 : f32 to vector<8x8xf32>
    %200 = arith.maximumf %199, %198 : vector<8x8xf32>
    %201 = vector.broadcast %cst_69 : f32 to vector<8x8xf32>
    %202 = arith.minimumf %201, %200 : vector<8x8xf32>
    %203 = arith.mulf %164, %202 : vector<8x8xf32>
    %204 = arith.addf %203, %19 : vector<8x8xf32>
    %cst_70 = arith.constant dense<0xFF800000> : vector<8xf32>
    %205 = vector.multi_reduction <maximumf>, %204, %cst_70 [1] : vector<8x8xf32> to vector<8xf32>
    %206 = vector.shape_cast %205 : vector<8xf32> to vector<8x1xf32>
    %207 = vector.broadcast %206 : vector<8x1xf32> to vector<8x8xf32>
    %208 = arith.subf %204, %207 : vector<8x8xf32>
    %209 = math.exp %208 : vector<8x8xf32>
    %cst_71 = arith.constant dense<0.000000e+00> : vector<8xf32>
    %210 = vector.multi_reduction <add>, %209, %cst_71 [1] : vector<8x8xf32> to vector<8xf32>
    %211 = vector.shape_cast %210 : vector<8xf32> to vector<8x1xf32>
    %212 = tpu.reciprocal %211 {approx = true} : vector<8x1xf32> -> vector<8x1xf32>
    %213 = vector.broadcast %212 : vector<8x1xf32> to vector<8x8xf32>
    %214 = arith.mulf %209, %213 : vector<8x8xf32>
    %215 = arith.truncf %214 : vector<8x8xf32> to vector<8x8xbf16>
    %cst_72 = arith.constant dense<0.000000e+00> : vector<8x8xf32>
    %216 = tpu.matmul %215, %161, %cst_72 {dimension_numbers = #tpu.dot_dimension_numbers<[1], [0], [0], [1], [0, 0, 1, 1], [], []>} : vector<8x8xbf16>, vector<8x8xbf16>, vector<8x8xf32> -> vector<8x8xf32>
    %217 = arith.truncf %216 : vector<8x8xf32> to vector<8x8xbf16>
    %c16 = arith.constant 16 : index
    %c0_73 = arith.constant 0 : index
    %218 = vector.load %arg12[%c16, %c0_73] : memref<32x32xbf16, #tpu.memory_space<vmem>>, vector<8x32xbf16>
    %cst_74 = arith.constant dense<0.000000e+00> : vector<8x32xf32>
    %219 = tpu.matmul %217, %218, %cst_74 {dimension_numbers = #tpu.dot_dimension_numbers<[1], [0], [0], [1], [0, 0, 1, 1], [], []>} : vector<8x8xbf16>, vector<8x32xbf16>, vector<8x32xf32> -> vector<8x32xf32>
    %220 = arith.addf %158, %219 : vector<8x32xf32>
    %221 = vector.extract_strided_slice %11 {offsets = [0, 24], sizes = [8, 8], strides = [1, 1]} : vector<8x32xbf16> to vector<8x8xbf16>
    %222 = vector.extract_strided_slice %12 {offsets = [0, 24], sizes = [8, 8], strides = [1, 1]} : vector<8x32xbf16> to vector<8x8xbf16>
    %223 = vector.extract_strided_slice %13 {offsets = [0, 24], sizes = [8, 8], strides = [1, 1]} : vector<8x32xbf16> to vector<8x8xbf16>
    %cst_75 = arith.constant dense<0.000000e+00> : vector<8x8xf32>
    %224 = tpu.matmul %221, %222, %cst_75 {dimension_numbers = #tpu.dot_dimension_numbers<[1], [1], [0], [0], [0, 0, 1, 0], [], []>} : vector<8x8xbf16>, vector<8x8xbf16>, vector<8x8xf32> -> vector<8x8xf32>
    %cst_76 = arith.constant 0.353553385 : f32
    %225 = vector.broadcast %cst_76 : f32 to vector<8x8xf32>
    %226 = arith.mulf %224, %225 : vector<8x8xf32>
    %227 = arith.addf %226, %19 : vector<8x8xf32>
    %cst_77 = arith.constant dense<0xFF800000> : vector<8xf32>
    %228 = vector.multi_reduction <maximumf>, %227, %cst_77 [1] : vector<8x8xf32> to vector<8xf32>
    %229 = vector.shape_cast %228 : vector<8xf32> to vector<8x1xf32>
    %230 = vector.broadcast %229 : vector<8x1xf32> to vector<8x8xf32>
    %231 = arith.subf %227, %230 : vector<8x8xf32>
    %232 = math.exp %231 : vector<8x8xf32>
    %cst_78 = arith.constant dense<0.000000e+00> : vector<8xf32>
    %233 = vector.multi_reduction <add>, %232, %cst_78 [1] : vector<8x8xf32> to vector<8xf32>
    %234 = vector.shape_cast %233 : vector<8xf32> to vector<8x1xf32>
    %235 = tpu.reciprocal %234 {approx = true} : vector<8x1xf32> -> vector<8x1xf32>
    %236 = vector.broadcast %235 : vector<8x1xf32> to vector<8x8xf32>
    %237 = arith.mulf %232, %236 : vector<8x8xf32>
    %238 = arith.mulf %237, %14 : vector<8x8xf32>
    %cst_79 = arith.constant dense<0.000000e+00> : vector<8xf32>
    %239 = vector.multi_reduction <add>, %238, %cst_79 [1] : vector<8x8xf32> to vector<8xf32>
    %240 = vector.shape_cast %239 : vector<8xf32> to vector<8x1xf32>
    %cst_80 = arith.constant 0.000000e+00 : f32
    %241 = vector.broadcast %cst_80 : f32 to vector<8x1xf32>
    %242 = vector.extract_strided_slice %238 {offsets = [0, 0], sizes = [8, 7], strides = [1, 1]} : vector<8x8xf32> to vector<8x7xf32>
    %243 = tpu.concatenate %241, %242 in 1 : vector<8x1xf32>, vector<8x7xf32> -> vector<8x8xf32>
    %244 = arith.addf %238, %243 : vector<8x8xf32>
    %cst_81 = arith.constant 0.000000e+00 : f32
    %245 = vector.broadcast %cst_81 : f32 to vector<8x2xf32>
    %246 = vector.extract_strided_slice %244 {offsets = [0, 0], sizes = [8, 6], strides = [1, 1]} : vector<8x8xf32> to vector<8x6xf32>
    %247 = tpu.concatenate %245, %246 in 1 : vector<8x2xf32>, vector<8x6xf32> -> vector<8x8xf32>
    %248 = arith.addf %244, %247 : vector<8x8xf32>
    %cst_82 = arith.constant 0.000000e+00 : f32
    %249 = vector.broadcast %cst_82 : f32 to vector<8x4xf32>
    %250 = vector.extract_strided_slice %248 {offsets = [0, 0], sizes = [8, 4], strides = [1, 1]} : vector<8x8xf32> to vector<8x4xf32>
    %251 = tpu.concatenate %249, %250 in 1 : vector<8x4xf32>, vector<8x4xf32> -> vector<8x8xf32>
    %252 = arith.addf %248, %251 : vector<8x8xf32>
    %253 = vector.broadcast %240 : vector<8x1xf32> to vector<8x8xf32>
    %254 = arith.subf %253, %252 : vector<8x8xf32>
    %255 = arith.mulf %254, %21 : vector<8x8xf32>
    %cst_83 = arith.constant 0.000000e+00 : f32
    %256 = vector.broadcast %cst_83 : f32 to vector<8x8xf32>
    %257 = arith.maximumf %255, %256 : vector<8x8xf32>
    %258 = math.sqrt %257 : vector<8x8xf32>
    %259 = arith.mulf %258, %35 : vector<8x8xf32>
    %260 = math.exp %259 : vector<8x8xf32>
    %cst_84 = arith.constant 9.99999974E-6 : f32
    %cst_85 = arith.constant 1.000000e+05 : f32
    %261 = vector.broadcast %cst_84 : f32 to vector<8x8xf32>
    %262 = arith.maximumf %261, %260 : vector<8x8xf32>
    %263 = vector.broadcast %cst_85 : f32 to vector<8x8xf32>
    %264 = arith.minimumf %263, %262 : vector<8x8xf32>
    %265 = arith.mulf %226, %264 : vector<8x8xf32>
    %266 = arith.addf %265, %19 : vector<8x8xf32>
    %cst_86 = arith.constant dense<0xFF800000> : vector<8xf32>
    %267 = vector.multi_reduction <maximumf>, %266, %cst_86 [1] : vector<8x8xf32> to vector<8xf32>
    %268 = vector.shape_cast %267 : vector<8xf32> to vector<8x1xf32>
    %269 = vector.broadcast %268 : vector<8x1xf32> to vector<8x8xf32>
    %270 = arith.subf %266, %269 : vector<8x8xf32>
    %271 = math.exp %270 : vector<8x8xf32>
    %cst_87 = arith.constant dense<0.000000e+00> : vector<8xf32>
    %272 = vector.multi_reduction <add>, %271, %cst_87 [1] : vector<8x8xf32> to vector<8xf32>
    %273 = vector.shape_cast %272 : vector<8xf32> to vector<8x1xf32>
    %274 = tpu.reciprocal %273 {approx = true} : vector<8x1xf32> -> vector<8x1xf32>
    %275 = vector.broadcast %274 : vector<8x1xf32> to vector<8x8xf32>
    %276 = arith.mulf %271, %275 : vector<8x8xf32>
    %277 = arith.truncf %276 : vector<8x8xf32> to vector<8x8xbf16>
    %cst_88 = arith.constant dense<0.000000e+00> : vector<8x8xf32>
    %278 = tpu.matmul %277, %223, %cst_88 {dimension_numbers = #tpu.dot_dimension_numbers<[1], [0], [0], [1], [0, 0, 1, 1], [], []>} : vector<8x8xbf16>, vector<8x8xbf16>, vector<8x8xf32> -> vector<8x8xf32>
    %279 = arith.truncf %278 : vector<8x8xf32> to vector<8x8xbf16>
    %c24 = arith.constant 24 : index
    %c0_89 = arith.constant 0 : index
    %280 = vector.load %arg12[%c24, %c0_89] : memref<32x32xbf16, #tpu.memory_space<vmem>>, vector<8x32xbf16>
    %cst_90 = arith.constant dense<0.000000e+00> : vector<8x32xf32>
    %281 = tpu.matmul %279, %280, %cst_90 {dimension_numbers = #tpu.dot_dimension_numbers<[1], [0], [0], [1], [0, 0, 1, 1], [], []>} : vector<8x8xbf16>, vector<8x32xbf16>, vector<8x32xf32> -> vector<8x32xf32>
    %282 = arith.addf %220, %281 : vector<8x32xf32>
    %283 = tpu.iota {dimensions = array<i32: 0>} : vector<8x1xi32>
    %c0_i32_91 = arith.constant 0 : i32
    %284 = vector.broadcast %c0_i32_91 : i32 to vector<8x1xi32>
    %285 = arith.cmpi eq, %283, %284 : vector<8x1xi32>
    %c0_i32_92 = arith.constant 0 : i32
    %286 = arith.cmpi eq, %arg1, %c0_i32_92 : i32
    %287 = vector.broadcast %286 : i1 to vector<8x1xi1>
    %288 = arith.andi %285, %287 : vector<8x1xi1>
    %cst_93 = arith.constant 0.000000e+00 : f32
    %289 = vector.shape_cast %288 : vector<8x1xi1> to vector<8x1xi1>
    %290 = vector.broadcast %289 : vector<8x1xi1> to vector<8x32xi1>
    %291 = vector.broadcast %cst_93 : f32 to vector<8x32xf32>
    %292 = arith.select %290, %291, %282 : vector<8x32xi1>, vector<8x32xf32>
    %293 = arith.addf %4, %292 : vector<8x32xf32>
    %c0_94 = arith.constant 0 : index
    %c0_95 = arith.constant 0 : index
    %294 = vector.load %arg13[%c0_94, %c0_95] : memref<1x32xf32, #tpu.memory_space<vmem>>, vector<1x32xf32>
    %295 = vector.broadcast %294 : vector<1x32xf32> to vector<8x32xf32>
    %296 = arith.addf %293, %295 : vector<8x32xf32>
    %cst_96 = arith.constant dense<0.000000e+00> : vector<8xf32>
    %297 = vector.multi_reduction <add>, %296, %cst_96 [1] : vector<8x32xf32> to vector<8xf32>
    %298 = vector.shape_cast %297 : vector<8xf32> to vector<8x1xf32>
    %cst_97 = arith.constant 3.200000e+01 : f32
    %299 = vector.broadcast %cst_97 : f32 to vector<8x1xf32>
    %300 = arith.divf %298, %299 : vector<8x1xf32>
    %301 = vector.broadcast %300 : vector<8x1xf32> to vector<8x32xf32>
    %302 = arith.subf %296, %301 : vector<8x32xf32>
    %303 = arith.mulf %302, %302 : vector<8x32xf32>
    %cst_98 = arith.constant dense<0.000000e+00> : vector<8xf32>
    %304 = vector.multi_reduction <add>, %303, %cst_98 [1] : vector<8x32xf32> to vector<8xf32>
    %305 = vector.shape_cast %304 : vector<8xf32> to vector<8x1xf32>
    %cst_99 = arith.constant 3.200000e+01 : f32
    %306 = vector.broadcast %cst_99 : f32 to vector<8x1xf32>
    %307 = arith.divf %305, %306 : vector<8x1xf32>
    %308 = vector.broadcast %300 : vector<8x1xf32> to vector<8x32xf32>
    %309 = arith.subf %296, %308 : vector<8x32xf32>
    %cst_100 = arith.constant 9.99999974E-6 : f32
    %310 = vector.broadcast %cst_100 : f32 to vector<8x1xf32>
    %311 = arith.addf %307, %310 : vector<8x1xf32>
    %312 = math.rsqrt %311 : vector<8x1xf32>
    %313 = vector.broadcast %312 : vector<8x1xf32> to vector<8x32xf32>
    %314 = arith.mulf %309, %313 : vector<8x32xf32>
    %c0_101 = arith.constant 0 : index
    %c0_102 = arith.constant 0 : index
    %315 = vector.load %arg14[%c0_101, %c0_102] : memref<1x32xf32, #tpu.memory_space<vmem>>, vector<1x32xf32>
    %316 = vector.broadcast %315 : vector<1x32xf32> to vector<8x32xf32>
    %317 = arith.mulf %314, %316 : vector<8x32xf32>
    %c0_103 = arith.constant 0 : index
    %c0_104 = arith.constant 0 : index
    %318 = vector.load %arg15[%c0_103, %c0_104] : memref<1x32xf32, #tpu.memory_space<vmem>>, vector<1x32xf32>
    %319 = vector.broadcast %318 : vector<1x32xf32> to vector<8x32xf32>
    %320 = arith.addf %317, %319 : vector<8x32xf32>
    %321 = arith.truncf %320 : vector<8x32xf32> to vector<8x32xbf16>
    %c0_105 = arith.constant 0 : index
    %c0_106 = arith.constant 0 : index
    %322 = vector.load %arg16[%c0_105, %c0_106] : memref<32x64xbf16, #tpu.memory_space<vmem>>, vector<32x64xbf16>
    %cst_107 = arith.constant dense<0.000000e+00> : vector<8x64xf32>
    %323 = tpu.matmul %321, %322, %cst_107 {dimension_numbers = #tpu.dot_dimension_numbers<[1], [0], [0], [1], [0, 0, 1, 1], [], []>} : vector<8x32xbf16>, vector<32x64xbf16>, vector<8x64xf32> -> vector<8x64xf32>
    %c0_108 = arith.constant 0 : index
    %c0_109 = arith.constant 0 : index
    %324 = vector.load %arg17[%c0_108, %c0_109] : memref<1x64xf32, #tpu.memory_space<vmem>>, vector<1x64xf32>
    %325 = vector.broadcast %324 : vector<1x64xf32> to vector<8x64xf32>
    %326 = arith.addf %323, %325 : vector<8x64xf32>
    %cst_110 = arith.constant 0.000000e+00 : f32
    %327 = vector.broadcast %cst_110 : f32 to vector<8x64xf32>
    %328 = arith.maximumf %326, %327 : vector<8x64xf32>
    %329 = arith.truncf %328 : vector<8x64xf32> to vector<8x64xbf16>
    %c0_111 = arith.constant 0 : index
    %c0_112 = arith.constant 0 : index
    %330 = vector.load %arg18[%c0_111, %c0_112] : memref<64x32xbf16, #tpu.memory_space<vmem>>, vector<64x32xbf16>
    %cst_113 = arith.constant dense<0.000000e+00> : vector<8x32xf32>
    %331 = tpu.matmul %329, %330, %cst_113 {dimension_numbers = #tpu.dot_dimension_numbers<[1], [0], [0], [1], [0, 0, 1, 1], [], []>} : vector<8x64xbf16>, vector<64x32xbf16>, vector<8x32xf32> -> vector<8x32xf32>
    %c0_114 = arith.constant 0 : index
    %c0_115 = arith.constant 0 : index
    %332 = vector.load %arg19[%c0_114, %c0_115] : memref<1x32xf32, #tpu.memory_space<vmem>>, vector<1x32xf32>
    %333 = vector.broadcast %332 : vector<1x32xf32> to vector<8x32xf32>
    %334 = arith.addf %331, %333 : vector<8x32xf32>
    %335 = arith.addf %320, %334 : vector<8x32xf32>
    %cst_116 = arith.constant dense<0.000000e+00> : vector<8xf32>
    %336 = vector.multi_reduction <add>, %335, %cst_116 [1] : vector<8x32xf32> to vector<8xf32>
    %337 = vector.shape_cast %336 : vector<8xf32> to vector<8x1xf32>
    %cst_117 = arith.constant 3.200000e+01 : f32
    %338 = vector.broadcast %cst_117 : f32 to vector<8x1xf32>
    %339 = arith.divf %337, %338 : vector<8x1xf32>
    %340 = vector.broadcast %339 : vector<8x1xf32> to vector<8x32xf32>
    %341 = arith.subf %335, %340 : vector<8x32xf32>
    %342 = arith.mulf %341, %341 : vector<8x32xf32>
    %cst_118 = arith.constant dense<0.000000e+00> : vector<8xf32>
    %343 = vector.multi_reduction <add>, %342, %cst_118 [1] : vector<8x32xf32> to vector<8xf32>
    %344 = vector.shape_cast %343 : vector<8xf32> to vector<8x1xf32>
    %cst_119 = arith.constant 3.200000e+01 : f32
    %345 = vector.broadcast %cst_119 : f32 to vector<8x1xf32>
    %346 = arith.divf %344, %345 : vector<8x1xf32>
    %347 = vector.broadcast %339 : vector<8x1xf32> to vector<8x32xf32>
    %348 = arith.subf %335, %347 : vector<8x32xf32>
    %cst_120 = arith.constant 9.99999974E-6 : f32
    %349 = vector.broadcast %cst_120 : f32 to vector<8x1xf32>
    %350 = arith.addf %346, %349 : vector<8x1xf32>
    %351 = math.rsqrt %350 : vector<8x1xf32>
    %352 = vector.broadcast %351 : vector<8x1xf32> to vector<8x32xf32>
    %353 = arith.mulf %348, %352 : vector<8x32xf32>
    %c0_121 = arith.constant 0 : index
    %c0_122 = arith.constant 0 : index
    %354 = vector.load %arg20[%c0_121, %c0_122] : memref<1x32xf32, #tpu.memory_space<vmem>>, vector<1x32xf32>
    %355 = vector.broadcast %354 : vector<1x32xf32> to vector<8x32xf32>
    %356 = arith.mulf %353, %355 : vector<8x32xf32>
    %c0_123 = arith.constant 0 : index
    %c0_124 = arith.constant 0 : index
    %357 = vector.load %arg21[%c0_123, %c0_124] : memref<1x32xf32, #tpu.memory_space<vmem>>, vector<1x32xf32>
    %358 = vector.broadcast %357 : vector<1x32xf32> to vector<8x32xf32>
    %359 = arith.addf %356, %358 : vector<8x32xf32>
    %c0_125 = arith.constant 0 : index
    %c0_126 = arith.constant 0 : index
    %c0_127 = arith.constant 0 : index
    %360 = vector.load %arg22[%c0_125, %c0_126, %c0_127] : memref<1x8x32xf32, #tpu.memory_space<vmem>>, vector<1x8x32xf32>
    %361 = vector.shape_cast %360 : vector<1x8x32xf32> to vector<8x32xf32>
    %362 = vector.shape_cast %359 : vector<8x32xf32> to vector<1x8x32xf32>
    tpu.vector_store %arg22[%c0_125, %c0_126, %c0_127], %362 {strides = array<i32>} : memref<1x8x32xf32, #tpu.memory_space<vmem>>, vector<1x8x32xf32>,
    return
  }
  func.func @transform_0(%arg0: i32, %arg1: i32) -> (i32, i32, i32) {
    %c0_i32 = arith.constant 0 : i32
    %c0_i32_0 = arith.constant 0 : i32
    return %arg0, %arg1, %c0_i32 : i32, i32, i32
  }
  func.func @transform_1(%arg0: i32, %arg1: i32) -> (i32, i32, i32) {
    %c0_i32 = arith.constant 0 : i32
    %c0_i32_0 = arith.constant 0 : i32
    %c0_i32_1 = arith.constant 0 : i32
    return %arg0, %c0_i32, %c0_i32_0 : i32, i32, i32
  }
  func.func @transform_2(%arg0: i32, %arg1: i32) -> (i32, i32, i32) {
    %c0_i32 = arith.constant 0 : i32
    %c0_i32_0 = arith.constant 0 : i32
    %c0_i32_1 = arith.constant 0 : i32
    return %arg0, %c0_i32, %c0_i32_0 : i32, i32, i32
  }
  func.func @transform_3(%arg0: i32, %arg1: i32) -> (i32, i32, i32) {
    %c0_i32 = arith.constant 0 : i32
    %c0_i32_0 = arith.constant 0 : i32
    return %arg0, %arg1, %c0_i32 : i32, i32, i32
  }
  func.func @transform_4(%arg0: i32, %arg1: i32) -> (i32, i32, i32) {
    %c0_i32 = arith.constant 0 : i32
    %c0_i32_0 = arith.constant 0 : i32
    return %arg0, %arg1, %c0_i32 : i32, i32, i32
  }
  func.func @transform_5(%arg0: i32, %arg1: i32) -> (i32, i32) {
    %c0_i32 = arith.constant 0 : i32
    %c0_i32_0 = arith.constant 0 : i32
    return %arg1, %c0_i32 : i32, i32
  }
  func.func @transform_6(%arg0: i32, %arg1: i32) -> (i32, i32) {
    %c0_i32 = arith.constant 0 : i32
    %c0_i32_0 = arith.constant 0 : i32
    %c0_i32_1 = arith.constant 0 : i32
    return %c0_i32, %c0_i32_0 : i32, i32
  }
  func.func @transform_7(%arg0: i32, %arg1: i32) -> (i32, i32) {
    %c0_i32 = arith.constant 0 : i32
    %c0_i32_0 = arith.constant 0 : i32
    %c0_i32_1 = arith.constant 0 : i32
    return %c0_i32, %c0_i32_0 : i32, i32
  }
  func.func @transform_8(%arg0: i32, %arg1: i32) -> (i32, i32) {
    %c0_i32 = arith.constant 0 : i32
    %c0_i32_0 = arith.constant 0 : i32
    %c0_i32_1 = arith.constant 0 : i32
    return %c0_i32, %c0_i32_0 : i32, i32
  }
  func.func @transform_9(%arg0: i32, %arg1: i32) -> (i32, i32) {
    %c0_i32 = arith.constant 0 : i32
    %c0_i32_0 = arith.constant 0 : i32
    %c0_i32_1 = arith.constant 0 : i32
    return %c0_i32, %c0_i32_0 : i32, i32
  }
  func.func @transform_10(%arg0: i32, %arg1: i32) -> (i32, i32) {
    %c0_i32 = arith.constant 0 : i32
    %c0_i32_0 = arith.constant 0 : i32
    %c0_i32_1 = arith.constant 0 : i32
    return %c0_i32, %c0_i32_0 : i32, i32
  }
  func.func @transform_11(%arg0: i32, %arg1: i32) -> (i32, i32) {
    %c0_i32 = arith.constant 0 : i32
    %c0_i32_0 = arith.constant 0 : i32
    %c0_i32_1 = arith.constant 0 : i32
    return %c0_i32, %c0_i32_0 : i32, i32
  }
  func.func @transform_12(%arg0: i32, %arg1: i32) -> (i32, i32) {
    %c0_i32 = arith.constant 0 : i32
    %c0_i32_0 = arith.constant 0 : i32
    %c0_i32_1 = arith.constant 0 : i32
    return %c0_i32, %c0_i32_0 : i32, i32
  }
  func.func @transform_13(%arg0: i32, %arg1: i32) -> (i32, i32) {
    %c0_i32 = arith.constant 0 : i32
    %c0_i32_0 = arith.constant 0 : i32
    %c0_i32_1 = arith.constant 0 : i32
    return %c0_i32, %c0_i32_0 : i32, i32
  }
  func.func @transform_14(%arg0: i32, %arg1: i32) -> (i32, i32) {
    %c0_i32 = arith.constant 0 : i32
    %c0_i32_0 = arith.constant 0 : i32
    %c0_i32_1 = arith.constant 0 : i32
    return %c0_i32, %c0_i32_0 : i32, i32
  }
  func.func @transform_15(%arg0: i32, %arg1: i32) -> (i32, i32) {
    %c0_i32 = arith.constant 0 : i32
    %c0_i32_0 = arith.constant 0 : i32
    %c0_i32_1 = arith.constant 0 : i32
    return %c0_i32, %c0_i32_0 : i32, i32
  }
  func.func @transform_16(%arg0: i32, %arg1: i32) -> (i32, i32) {
    %c0_i32 = arith.constant 0 : i32
    %c0_i32_0 = arith.constant 0 : i32
    %c0_i32_1 = arith.constant 0 : i32
    return %c0_i32, %c0_i32_0 : i32, i32
  }
  func.func @transform_17(%arg0: i32, %arg1: i32) -> (i32, i32) {
    %c0_i32 = arith.constant 0 : i32
    %c0_i32_0 = arith.constant 0 : i32
    %c0_i32_1 = arith.constant 0 : i32
    return %c0_i32, %c0_i32_0 : i32, i32
  }
  func.func @transform_18(%arg0: i32, %arg1: i32) -> (i32, i32) {
    %c0_i32 = arith.constant 0 : i32
    %c0_i32_0 = arith.constant 0 : i32
    %c0_i32_1 = arith.constant 0 : i32
    return %c0_i32, %c0_i32_0 : i32, i32
  }
  func.func @transform_19(%arg0: i32, %arg1: i32) -> (i32, i32) {
    %c0_i32 = arith.constant 0 : i32
    %c0_i32_0 = arith.constant 0 : i32
    %c0_i32_1 = arith.constant 0 : i32
    return %c0_i32, %c0_i32_0 : i32, i32
  }
  func.func @transform_20(%arg0: i32, %arg1: i32) -> (i32, i32, i32) {
    %c0_i32 = arith.constant 0 : i32
    %c0_i32_0 = arith.constant 0 : i32
    return %arg0, %arg1, %c0_i32 : i32, i32, i32
  }
}

</mosaic_0001>

<llo_original>
// kernel: tpu_custom_call.1
$region0: #{tpu_custom_call.1}
  #allocation0 [shape = 'u32[]', space=smem, size = 0x4, offset = 0x4, fixed_abs, tag = 'smem constant byte address 0x4 - core index']
  #allocation1 [shape = 'u32[72,128]{1,0:T(1,128)}', space=vmem, size = 0x9000, scoped, tag = 'internal scratch']
  #allocation2 [shape = 'bf16[8,32]{1,0:T(8,128)(2,1)}', space=vmem, size = 0x800, scoped, tag = 'scratch operand']
  #allocation3 [shape = 'bf16[8,32]{1,0:T(8,128)(2,1)}', space=vmem, size = 0x800, scoped, tag = 'scratch operand']
  %s0 = inlined_call_operand.vmem [shape: f32[2,8,32], index: 0, kind: input, shape index: {}]
  %s1 = inlined_call_operand.vmem [shape: f32[2,8,32], index: 1, kind: input, shape index: {}]
  %s2 = inlined_call_operand.vmem [shape: f32[2,8,32], index: 2, kind: input, shape index: {}]
  %s3 = inlined_call_operand.hbm [shape: f32[2,8,8], index: 3, kind: input, shape index: {}]
  %s4 = inlined_call_operand.hbm [shape: f32[2,8,8], index: 4, kind: input, shape index: {}]
  %s5 = inlined_call_operand.hbm [shape: f32[8,8], index: 5, kind: input, shape index: {}]
  %s6 = inlined_call_operand.hbm [shape: bf16[32,32], index: 6, kind: input, shape index: {}]
  %s7 = inlined_call_operand.hbm [shape: bf16[32,32], index: 7, kind: input, shape index: {}]
  %s8 = inlined_call_operand.vmem [shape: f32[1,32], index: 8, kind: input, shape index: {}]
  %s9 = inlined_call_operand.vmem [shape: f32[1,32], index: 9, kind: input, shape index: {}]
  %s10 = inlined_call_operand.hbm [shape: bf16[32,32], index: 10, kind: input, shape index: {}]
  %s11 = inlined_call_operand.vmem [shape: f32[1,32], index: 11, kind: input, shape index: {}]
  %s12 = inlined_call_operand.vmem [shape: f32[1,32], index: 12, kind: input, shape index: {}]
  %s13 = inlined_call_operand.vmem [shape: f32[1,32], index: 13, kind: input, shape index: {}]
  %s14 = inlined_call_operand.hbm [shape: bf16[32,64], index: 14, kind: input, shape index: {}]
  %s15 = inlined_call_operand.vmem [shape: f32[1,64], index: 15, kind: input, shape index: {}]
  %s16 = inlined_call_operand.vmem [shape: bf16[64,32], index: 16, kind: input, shape index: {}]
  %s17 = inlined_call_operand.vmem [shape: f32[1,32], index: 17, kind: input, shape index: {}]
  %s18 = inlined_call_operand.vmem [shape: f32[1,32], index: 18, kind: input, shape index: {}]
  %s19 = inlined_call_operand.vmem [shape: f32[1,32], index: 19, kind: input, shape index: {}]
  %s20 = inlined_call_operand.hbm [shape: f32[2,8,32], index: 20, kind: output, shape index: {}]
  %s21 = sld [smem:[#allocation0]]
  $region145: #{tpu_custom_call.1} parent=0
    _
  %s23 = ssub.s32 1, %s21
  %s24 = scalar_select 0, %s23, %s21
  $region1: #{tpu_custom_call.1} parent=0
    #allocation4 [shape = 'u8[8192]{0}', space=vmem, size = 0x2000, scoped, tag = 'input window, operand 3']
    #allocation5 [shape = 's32[2]{0}', space=sflag, size = 0x8, scoped, tag = 'scoped memory for tpu_custom_call.1']
    #allocation6 [shape = 's32[2]{0}', space=sflag, size = 0x8, scoped, tag = 'scoped memory for tpu_custom_call.1']
    #allocation7 [shape = 'u8[8192]{0}', space=vmem, size = 0x2000, scoped, tag = 'input window, operand 4']
    #allocation8 [shape = 's32[2]{0}', space=sflag, size = 0x8, scoped, tag = 'scoped memory for tpu_custom_call.1']
    #allocation9 [shape = 'u8[4096]{0}', space=vmem, size = 0x1000, scoped, tag = 'input window, operand 5, single buffered']
    #allocation10 [shape = 'u8[8192]{0}', space=vmem, size = 0x2000, scoped, tag = 'input window, operand 6, single buffered']
    #allocation11 [shape = 's32[1]{0}', space=sflag, size = 0x4, scoped, tag = 'scoped memory for tpu_custom_call.1']
    #allocation12 [shape = 'u8[8192]{0}', space=vmem, size = 0x2000, scoped, tag = 'input window, operand 7, single buffered']
    #allocation13 [shape = 'u8[8192]{0}', space=vmem, size = 0x2000, scoped, tag = 'input window, operand 10, single buffered']
    #allocation14 [shape = 's32[1]{0}', space=sflag, size = 0x4, scoped, tag = 'scoped memory for tpu_custom_call.1']
    #allocation15 [shape = 'u8[8192]{0}', space=vmem, size = 0x2000, scoped, tag = 'input window, operand 14, single buffered']
    #allocation16 [shape = 'u8[8192]{0}', space=vmem, size = 0x2000, scoped, tag = 'output window, operand 0']
    %25 = vsyncpa [#allocation5], 0
    %s26 = scalar_lea.sflag [#allocation5], 1
    %27 = vsyncpa %s26, 0
    %28 = vsyncpa [#allocation8], 0
    %s29 = scalar_lea.sflag [#allocation8], 1
    %30 = vsyncpa %s29, 0
    %31 = vsyncpa [#allocation11], 0
    %32 = vsyncpa [#allocation14], 0
    %33 = vsyncpa [#allocation6], 0
    %s34 = scalar_lea.sflag [#allocation6], 1
    %35 = vsyncpa %s34, 0
    loop: start=0, step=1, limit=4
    $region2: #{tpu_custom_call.1} parent=1 // loop_pre_header
      _
    $region3: #{tpu_custom_call.1} parent=1 // loop_header
      %s37 = sphi 0, %s41
      %p38 = scmp.ge.s32.totalorder %s37, 4
      %s44 = sphi 0, %s56
      %s45 = sphi 0, %s52
      %s46 = sphi 0, %s44
      %s47 = sphi 0, %s45
      %s48 = sphi 0, %s46
      %s49 = sphi 0, %s47
      %s61 = sphi 0, %s63
      %s64 = sphi 0, %s61
      %s65 = sphi 0, %s64
      %s81 = sphi 0, %s65
      %s87 = sphi 0, %s89
      %s90 = sphi 0, %s87
      %s91 = sphi 0, %s90
      %s107 = sphi 0, %s91
      %s113 = sphi 0, %s115
      %s116 = sphi 0, %s113
      %s117 = sphi 0, %s116
      %s133 = sphi 0, %s117
      %s141 = sphi 0, %s143
      %s144 = sphi 0, %s141
      %s145 = sphi 0, %s144
      %s161 = sphi 0, %s145
      %s169 = sphi 0, %s171
      %s172 = sphi 0, %s169
      %s173 = sphi 0, %s172
      %s189 = sphi 0, %s173
      %s195 = sphi 0, %s197
      %s198 = sphi 0, %s195
      %s199 = sphi 0, %s198
      %s215 = sphi 0, %s199
      %s219 = sphi 0, %s219
      %s221 = sphi 0, %s219
      %s222 = sphi 0, %s221
      %s236 = sphi 0, %s222
      %s240 = sphi 0, %s240
      %s242 = sphi 0, %s240
      %s243 = sphi 0, %s242
      %s257 = sphi 0, %s243
      %s261 = sphi 0, %s261
      %s263 = sphi 0, %s261
      %s264 = sphi 0, %s263
      %s278 = sphi 0, %s264
      %s282 = sphi 0, %s282
      %s284 = sphi 0, %s282
      %s285 = sphi 0, %s284
      %s299 = sphi 0, %s285
      %s303 = sphi 0, %s303
      %s305 = sphi 0, %s303
      %s306 = sphi 0, %s305
      %s320 = sphi 0, %s306
      %s324 = sphi 0, %s324
      %s326 = sphi 0, %s324
      %s327 = sphi 0, %s326
      %s341 = sphi 0, %s327
      %s345 = sphi 0, %s345
      %s347 = sphi 0, %s345
      %s348 = sphi 0, %s347
      %s362 = sphi 0, %s348
      %s366 = sphi 0, %s366
      %s368 = sphi 0, %s366
      %s369 = sphi 0, %s368
      %s383 = sphi 0, %s369
      %s387 = sphi 0, %s387
      %s389 = sphi 0, %s387
      %s390 = sphi 0, %s389
      %s404 = sphi 0, %s390
      %s408 = sphi 0, %s408
      %s410 = sphi 0, %s408
      %s411 = sphi 0, %s410
      %s425 = sphi 0, %s411
      %s429 = sphi 0, %s429
      %s431 = sphi 0, %s429
      %s432 = sphi 0, %s431
      %s446 = sphi 0, %s432
      %s450 = sphi 0, %s450
      %s452 = sphi 0, %s450
      %s453 = sphi 0, %s452
      %s467 = sphi 0, %s453
      %s471 = sphi 0, %s471
      %s473 = sphi 0, %s471
      %s474 = sphi 0, %s473
      %s488 = sphi 0, %s474
      %s492 = sphi 0, %s492
      %s494 = sphi 0, %s492
      %s495 = sphi 0, %s494
      %s509 = sphi 0, %s495
      %s517 = sphi 0, %s519
      %s520 = sphi 0, %s517
      %s521 = sphi 0, %s520
      %s537 = sphi 0, %s521
    $region4: #{tpu_custom_call.1} parent=1 // loop_header_branch
      %40 = sbr.rel (%p38) target = $region8
    $region5: #{tpu_custom_call.1} parent=1 // loop_body
      %s42 = ssub.s32 %s37, 1
      %s43 = ssub.s32 %s37, 2
      %s50 = sadd.s32 1, %s45
      %p51 = scmp.ge.s32.totalorder %s50, 1
      %s52 = scalar_select %p51, 0, %s50
      %s53 = sadd.s32 1, %s44
      %s54 = scalar_select %p51, %s53, %s44
      %p55 = scmp.ge.s32.totalorder %s54, 2
      %s56 = scalar_select %p55, 0, %s54
      %s57 = ssub.s32 %s44, %s56
      %s58 = ssub.s32 %s45, %s52
      %s59 = sor.u32 %s57, %s58
      %p60 = scmp.eq.s32.totalorder %s59, 0
      %s62 = sadd.s32 %s61, 1
      %s63 = scalar_select %p60, %s61, %s62
      %p66 = pneg %p60
      %p67 = scmp.eq.s32.totalorder %s37, 1
      %p68 = por %p66, %p67
      %p69 = scmp.ne.s32.totalorder %s61, %s64
      %p70 = scmp.eq.s32.totalorder %s37, 0
      %p71 = por %p69, %p70
      %p72 = scmp.ne.s32.totalorder %s61, %s64
      %p73 = scmp.eq.s32.totalorder %s42, 1
      %p74 = por %p72, %p73
      %p75 = scmp.ne.s32.totalorder %s64, %s65
      %p76 = scmp.eq.s32.totalorder %s42, 0
      %p77 = por %p75, %p76
      %p78 = scmp.ne.s32.totalorder %s64, %s65
      %p79 = scmp.eq.s32.totalorder %s43, 1
      %p80 = por %p78, %p79
      %p82 = scmp.ne.s32.totalorder %s65, %s81
      %p83 = scmp.eq.s32.totalorder %s43, 0
      %p84 = por %p82, %p83
      %s85 = ssub.s32 %s44, %s56
      %p86 = scmp.eq.s32.totalorder %s85, 0
      %s88 = sadd.s32 %s87, 1
      %s89 = scalar_select %p86, %s87, %s88
      %p92 = pneg %p86
      %p93 = scmp.eq.s32.totalorder %s37, 1
      %p94 = por %p92, %p93
      %p95 = scmp.ne.s32.totalorder %s87, %s90
      %p96 = scmp.eq.s32.totalorder %s37, 0
      %p97 = por %p95, %p96
      %p98 = scmp.ne.s32.totalorder %s87, %s90
      %p99 = scmp.eq.s32.totalorder %s42, 1
      %p100 = por %p98, %p99
      %p101 = scmp.ne.s32.totalorder %s90, %s91
      %p102 = scmp.eq.s32.totalorder %s42, 0
      %p103 = por %p101, %p102
      %p104 = scmp.ne.s32.totalorder %s90, %s91
      %p105 = scmp.eq.s32.totalorder %s43, 1
      %p106 = por %p104, %p105
      %p108 = scmp.ne.s32.totalorder %s91, %s107
      %p109 = scmp.eq.s32.totalorder %s43, 0
      %p110 = por %p108, %p109
      %s111 = ssub.s32 %s44, %s56
      %p112 = scmp.eq.s32.totalorder %s111, 0
      %s114 = sadd.s32 %s113, 1
      %s115 = scalar_select %p112, %s113, %s114
      %p118 = pneg %p112
      %p119 = scmp.eq.s32.totalorder %s37, 1
      %p120 = por %p118, %p119
      %p121 = scmp.ne.s32.totalorder %s113, %s116
      %p122 = scmp.eq.s32.totalorder %s37, 0
      %p123 = por %p121, %p122
      %p124 = scmp.ne.s32.totalorder %s113, %s116
      %p125 = scmp.eq.s32.totalorder %s42, 1
      %p126 = por %p124, %p125
      %p127 = scmp.ne.s32.totalorder %s116, %s117
      %p128 = scmp.eq.s32.totalorder %s42, 0
      %p129 = por %p127, %p128
      %p130 = scmp.ne.s32.totalorder %s116, %s117
      %p131 = scmp.eq.s32.totalorder %s43, 1
      %p132 = por %p130, %p131
      %p134 = scmp.ne.s32.totalorder %s117, %s133
      %p135 = scmp.eq.s32.totalorder %s43, 0
      %p136 = por %p134, %p135
      %s137 = ssub.s32 %s44, %s56
      %s138 = ssub.s32 %s45, %s52
      %s139 = sor.u32 %s137, %s138
      %p140 = scmp.eq.s32.totalorder %s139, 0
      %s142 = sadd.s32 %s141, 1
      %s143 = scalar_select %p140, %s141, %s142
      %p146 = pneg %p140
      %p147 = scmp.eq.s32.totalorder %s37, 1
      %p148 = por %p146, %p147
      %p149 = scmp.ne.s32.totalorder %s141, %s144
      %p150 = scmp.eq.s32.totalorder %s37, 0
      %p151 = por %p149, %p150
      %p152 = scmp.ne.s32.totalorder %s141, %s144
      %p153 = scmp.eq.s32.totalorder %s42, 1
      %p154 = por %p152, %p153
      %p155 = scmp.ne.s32.totalorder %s144, %s145
      %p156 = scmp.eq.s32.totalorder %s42, 0
      %p157 = por %p155, %p156
      %p158 = scmp.ne.s32.totalorder %s144, %s145
      %p159 = scmp.eq.s32.totalorder %s43, 1
      %p160 = por %p158, %p159
      %p162 = scmp.ne.s32.totalorder %s145, %s161
      %p163 = scmp.eq.s32.totalorder %s43, 0
      %p164 = por %p162, %p163
      %s165 = ssub.s32 %s44, %s56
      %s166 = ssub.s32 %s45, %s52
      %s167 = sor.u32 %s165, %s166
      %p168 = scmp.eq.s32.totalorder %s167, 0
      %s170 = sadd.s32 %s169, 1
      %s171 = scalar_select %p168, %s169, %s170
      %p174 = pneg %p168
      %p175 = scmp.eq.s32.totalorder %s37, 1
      %p176 = por %p174, %p175
      %p177 = scmp.ne.s32.totalorder %s169, %s172
      %p178 = scmp.eq.s32.totalorder %s37, 0
      %p179 = por %p177, %p178
      %p180 = scmp.ne.s32.totalorder %s169, %s172
      %p181 = scmp.eq.s32.totalorder %s42, 1
      %p182 = por %p180, %p181
      %p183 = scmp.ne.s32.totalorder %s172, %s173
      %p184 = scmp.eq.s32.totalorder %s42, 0
      %p185 = por %p183, %p184
      %p186 = scmp.ne.s32.totalorder %s172, %s173
      %p187 = scmp.eq.s32.totalorder %s43, 1
      %p188 = por %p186, %p187
      %p190 = scmp.ne.s32.totalorder %s173, %s189
      %p191 = scmp.eq.s32.totalorder %s43, 0
      %p192 = por %p190, %p191
      %s193 = ssub.s32 %s45, %s52
      %p194 = scmp.eq.s32.totalorder %s193, 0
      %s196 = sadd.s32 %s195, 1
      %s197 = scalar_select %p194, %s195, %s196
      %p200 = pneg %p194
      %p201 = scmp.eq.s32.totalorder %s37, 1
      %p202 = por %p200, %p201
      %p203 = scmp.ne.s32.totalorder %s195, %s198
      %p204 = scmp.eq.s32.totalorder %s37, 0
      %p205 = por %p203, %p204
      %p206 = scmp.ne.s32.totalorder %s195, %s198
      %p207 = scmp.eq.s32.totalorder %s42, 1
      %p208 = por %p206, %p207
      %p209 = scmp.ne.s32.totalorder %s198, %s199
      %p210 = scmp.eq.s32.totalorder %s42, 0
      %p211 = por %p209, %p210
      %p212 = scmp.ne.s32.totalorder %s198, %s199
      %p213 = scmp.eq.s32.totalorder %s43, 1
      %p214 = por %p212, %p213
      %p216 = scmp.ne.s32.totalorder %s199, %s215
      %p217 = scmp.eq.s32.totalorder %s43, 0
      %p218 = por %p216, %p217
      %s220 = sadd.s32 %s219, 1
      %p223 = scmp.eq.s32.totalorder %s37, 1
      %p224 = scmp.ne.s32.totalorder %s219, %s221
      %p225 = scmp.eq.s32.totalorder %s37, 0
      %p226 = por %p224, %p225
      %p227 = scmp.ne.s32.totalorder %s219, %s221
      %p228 = scmp.eq.s32.totalorder %s42, 1
      %p229 = por %p227, %p228
      %p230 = scmp.ne.s32.totalorder %s221, %s222
      %p231 = scmp.eq.s32.totalorder %s42, 0
      %p232 = por %p230, %p231
      %p233 = scmp.ne.s32.totalorder %s221, %s222
      %p234 = scmp.eq.s32.totalorder %s43, 1
      %p235 = por %p233, %p234
      %p237 = scmp.ne.s32.totalorder %s222, %s236
      %p238 = scmp.eq.s32.totalorder %s43, 0
      %p239 = por %p237, %p238
      %s241 = sadd.s32 %s240, 1
      %p244 = scmp.eq.s32.totalorder %s37, 1
      %p245 = scmp.ne.s32.totalorder %s240, %s242
      %p246 = scmp.eq.s32.totalorder %s37, 0
      %p247 = por %p245, %p246
      %p248 = scmp.ne.s32.totalorder %s240, %s242
      %p249 = scmp.eq.s32.totalorder %s42, 1
      %p250 = por %p248, %p249
      %p251 = scmp.ne.s32.totalorder %s242, %s243
      %p252 = scmp.eq.s32.totalorder %s42, 0
      %p253 = por %p251, %p252
      %p254 = scmp.ne.s32.totalorder %s242, %s243
      %p255 = scmp.eq.s32.totalorder %s43, 1
      %p256 = por %p254, %p255
      %p258 = scmp.ne.s32.totalorder %s243, %s257
      %p259 = scmp.eq.s32.totalorder %s43, 0
      %p260 = por %p258, %p259
      %s262 = sadd.s32 %s261, 1
      %p265 = scmp.eq.s32.totalorder %s37, 1
      %p266 = scmp.ne.s32.totalorder %s261, %s263
      %p267 = scmp.eq.s32.totalorder %s37, 0
      %p268 = por %p266, %p267
      %p269 = scmp.ne.s32.totalorder %s261, %s263
      %p270 = scmp.eq.s32.totalorder %s42, 1
      %p271 = por %p269, %p270
      %p272 = scmp.ne.s32.totalorder %s263, %s264
      %p273 = scmp.eq.s32.totalorder %s42, 0
      %p274 = por %p272, %p273
      %p275 = scmp.ne.s32.totalorder %s263, %s264
      %p276 = scmp.eq.s32.totalorder %s43, 1
      %p277 = por %p275, %p276
      %p279 = scmp.ne.s32.totalorder %s264, %s278
      %p280 = scmp.eq.s32.totalorder %s43, 0
      %p281 = por %p279, %p280
      %s283 = sadd.s32 %s282, 1
      %p286 = scmp.eq.s32.totalorder %s37, 1
      %p287 = scmp.ne.s32.totalorder %s282, %s284
      %p288 = scmp.eq.s32.totalorder %s37, 0
      %p289 = por %p287, %p288
      %p290 = scmp.ne.s32.totalorder %s282, %s284
      %p291 = scmp.eq.s32.totalorder %s42, 1
      %p292 = por %p290, %p291
      %p293 = scmp.ne.s32.totalorder %s284, %s285
      %p294 = scmp.eq.s32.totalorder %s42, 0
      %p295 = por %p293, %p294
      %p296 = scmp.ne.s32.totalorder %s284, %s285
      %p297 = scmp.eq.s32.totalorder %s43, 1
      %p298 = por %p296, %p297
      %p300 = scmp.ne.s32.totalorder %s285, %s299
      %p301 = scmp.eq.s32.totalorder %s43, 0
      %p302 = por %p300, %p301
      %s304 = sadd.s32 %s303, 1
      %p307 = scmp.eq.s32.totalorder %s37, 1
      %p308 = scmp.ne.s32.totalorder %s303, %s305
      %p309 = scmp.eq.s32.totalorder %s37, 0
      %p310 = por %p308, %p309
      %p311 = scmp.ne.s32.totalorder %s303, %s305
      %p312 = scmp.eq.s32.totalorder %s42, 1
      %p313 = por %p311, %p312
      %p314 = scmp.ne.s32.totalorder %s305, %s306
      %p315 = scmp.eq.s32.totalorder %s42, 0
      %p316 = por %p314, %p315
      %p317 = scmp.ne.s32.totalorder %s305, %s306
      %p318 = scmp.eq.s32.totalorder %s43, 1
      %p319 = por %p317, %p318
      %p321 = scmp.ne.s32.totalorder %s306, %s320
      %p322 = scmp.eq.s32.totalorder %s43, 0
      %p323 = por %p321, %p322
      %s325 = sadd.s32 %s324, 1
      %p328 = scmp.eq.s32.totalorder %s37, 1
      %p329 = scmp.ne.s32.totalorder %s324, %s326
      %p330 = scmp.eq.s32.totalorder %s37, 0
      %p331 = por %p329, %p330
      %p332 = scmp.ne.s32.totalorder %s324, %s326
      %p333 = scmp.eq.s32.totalorder %s42, 1
      %p334 = por %p332, %p333
      %p335 = scmp.ne.s32.totalorder %s326, %s327
      %p336 = scmp.eq.s32.totalorder %s42, 0
      %p337 = por %p335, %p336
      %p338 = scmp.ne.s32.totalorder %s326, %s327
      %p339 = scmp.eq.s32.totalorder %s43, 1
      %p340 = por %p338, %p339
      %p342 = scmp.ne.s32.totalorder %s327, %s341
      %p343 = scmp.eq.s32.totalorder %s43, 0
      %p344 = por %p342, %p343
      %s346 = sadd.s32 %s345, 1
      %p349 = scmp.eq.s32.totalorder %s37, 1
      %p350 = scmp.ne.s32.totalorder %s345, %s347
      %p351 = scmp.eq.s32.totalorder %s37, 0
      %p352 = por %p350, %p351
      %p353 = scmp.ne.s32.totalorder %s345, %s347
      %p354 = scmp.eq.s32.totalorder %s42, 1
      %p355 = por %p353, %p354
      %p356 = scmp.ne.s32.totalorder %s347, %s348
      %p357 = scmp.eq.s32.totalorder %s42, 0
      %p358 = por %p356, %p357
      %p359 = scmp.ne.s32.totalorder %s347, %s348
      %p360 = scmp.eq.s32.totalorder %s43, 1
      %p361 = por %p359, %p360
      %p363 = scmp.ne.s32.totalorder %s348, %s362
      %p364 = scmp.eq.s32.totalorder %s43, 0
      %p365 = por %p363, %p364
      %s367 = sadd.s32 %s366, 1
      %p370 = scmp.eq.s32.totalorder %s37, 1
      %p371 = scmp.ne.s32.totalorder %s366, %s368
      %p372 = scmp.eq.s32.totalorder %s37, 0
      %p373 = por %p371, %p372
      %p374 = scmp.ne.s32.totalorder %s366, %s368
      %p375 = scmp.eq.s32.totalorder %s42, 1
      %p376 = por %p374, %p375
      %p377 = scmp.ne.s32.totalorder %s368, %s369
      %p378 = scmp.eq.s32.totalorder %s42, 0
      %p379 = por %p377, %p378
      %p380 = scmp.ne.s32.totalorder %s368, %s369
      %p381 = scmp.eq.s32.totalorder %s43, 1
      %p382 = por %p380, %p381
      %p384 = scmp.ne.s32.totalorder %s369, %s383
      %p385 = scmp.eq.s32.totalorder %s43, 0
      %p386 = por %p384, %p385
      %s388 = sadd.s32 %s387, 1
      %p391 = scmp.eq.s32.totalorder %s37, 1
      %p392 = scmp.ne.s32.totalorder %s387, %s389
      %p393 = scmp.eq.s32.totalorder %s37, 0
      %p394 = por %p392, %p393
      %p395 = scmp.ne.s32.totalorder %s387, %s389
      %p396 = scmp.eq.s32.totalorder %s42, 1
      %p397 = por %p395, %p396
      %p398 = scmp.ne.s32.totalorder %s389, %s390
      %p399 = scmp.eq.s32.totalorder %s42, 0
      %p400 = por %p398, %p399
      %p401 = scmp.ne.s32.totalorder %s389, %s390
      %p402 = scmp.eq.s32.totalorder %s43, 1
      %p403 = por %p401, %p402
      %p405 = scmp.ne.s32.totalorder %s390, %s404
      %p406 = scmp.eq.s32.totalorder %s43, 0
      %p407 = por %p405, %p406
      %s409 = sadd.s32 %s408, 1
      %p412 = scmp.eq.s32.totalorder %s37, 1
      %p413 = scmp.ne.s32.totalorder %s408, %s410
      %p414 = scmp.eq.s32.totalorder %s37, 0
      %p415 = por %p413, %p414
      %p416 = scmp.ne.s32.totalorder %s408, %s410
      %p417 = scmp.eq.s32.totalorder %s42, 1
      %p418 = por %p416, %p417
      %p419 = scmp.ne.s32.totalorder %s410, %s411
      %p420 = scmp.eq.s32.totalorder %s42, 0
      %p421 = por %p419, %p420
      %p422 = scmp.ne.s32.totalorder %s410, %s411
      %p423 = scmp.eq.s32.totalorder %s43, 1
      %p424 = por %p422, %p423
      %p426 = scmp.ne.s32.totalorder %s411, %s425
      %p427 = scmp.eq.s32.totalorder %s43, 0
      %p428 = por %p426, %p427
      %s430 = sadd.s32 %s429, 1
      %p433 = scmp.eq.s32.totalorder %s37, 1
      %p434 = scmp.ne.s32.totalorder %s429, %s431
      %p435 = scmp.eq.s32.totalorder %s37, 0
      %p436 = por %p434, %p435
      %p437 = scmp.ne.s32.totalorder %s429, %s431
      %p438 = scmp.eq.s32.totalorder %s42, 1
      %p439 = por %p437, %p438
      %p440 = scmp.ne.s32.totalorder %s431, %s432
      %p441 = scmp.eq.s32.totalorder %s42, 0
      %p442 = por %p440, %p441
      %p443 = scmp.ne.s32.totalorder %s431, %s432
      %p444 = scmp.eq.s32.totalorder %s43, 1
      %p445 = por %p443, %p444
      %p447 = scmp.ne.s32.totalorder %s432, %s446
      %p448 = scmp.eq.s32.totalorder %s43, 0
      %p449 = por %p447, %p448
      %s451 = sadd.s32 %s450, 1
      %p454 = scmp.eq.s32.totalorder %s37, 1
      %p455 = scmp.ne.s32.totalorder %s450, %s452
      %p456 = scmp.eq.s32.totalorder %s37, 0
      %p457 = por %p455, %p456
      %p458 = scmp.ne.s32.totalorder %s450, %s452
      %p459 = scmp.eq.s32.totalorder %s42, 1
      %p460 = por %p458, %p459
      %p461 = scmp.ne.s32.totalorder %s452, %s453
      %p462 = scmp.eq.s32.totalorder %s42, 0
      %p463 = por %p461, %p462
      %p464 = scmp.ne.s32.totalorder %s452, %s453
      %p465 = scmp.eq.s32.totalorder %s43, 1
      %p466 = por %p464, %p465
      %p468 = scmp.ne.s32.totalorder %s453, %s467
      %p469 = scmp.eq.s32.totalorder %s43, 0
      %p470 = por %p468, %p469
      %s472 = sadd.s32 %s471, 1
      %p475 = scmp.eq.s32.totalorder %s37, 1
      %p476 = scmp.ne.s32.totalorder %s471, %s473
      %p477 = scmp.eq.s32.totalorder %s37, 0
      %p478 = por %p476, %p477
      %p479 = scmp.ne.s32.totalorder %s471, %s473
      %p480 = scmp.eq.s32.totalorder %s42, 1
      %p481 = por %p479, %p480
      %p482 = scmp.ne.s32.totalorder %s473, %s474
      %p483 = scmp.eq.s32.totalorder %s42, 0
      %p484 = por %p482, %p483
      %p485 = scmp.ne.s32.totalorder %s473, %s474
      %p486 = scmp.eq.s32.totalorder %s43, 1
      %p487 = por %p485, %p486
      %p489 = scmp.ne.s32.totalorder %s474, %s488
      %p490 = scmp.eq.s32.totalorder %s43, 0
      %p491 = por %p489, %p490
      %s493 = sadd.s32 %s492, 1
      %p496 = scmp.eq.s32.totalorder %s37, 1
      %p497 = scmp.ne.s32.totalorder %s492, %s494
      %p498 = scmp.eq.s32.totalorder %s37, 0
      %p499 = por %p497, %p498
      %p500 = scmp.ne.s32.totalorder %s492, %s494
      %p501 = scmp.eq.s32.totalorder %s42, 1
      %p502 = por %p500, %p501
      %p503 = scmp.ne.s32.totalorder %s494, %s495
      %p504 = scmp.eq.s32.totalorder %s42, 0
      %p505 = por %p503, %p504
      %p506 = scmp.ne.s32.totalorder %s494, %s495
      %p507 = scmp.eq.s32.totalorder %s43, 1
      %p508 = por %p506, %p507
      %p510 = scmp.ne.s32.totalorder %s495, %s509
      %p511 = scmp.eq.s32.totalorder %s43, 0
      %p512 = por %p510, %p511
      %s513 = ssub.s32 %s44, %s56
      %s514 = ssub.s32 %s45, %s52
      %s515 = sor.u32 %s513, %s514
      %p516 = scmp.eq.s32.totalorder %s515, 0
      %s518 = sadd.s32 %s517, 1
      %s519 = scalar_select %p516, %s517, %s518
      %p522 = pneg %p516
      %p523 = scmp.eq.s32.totalorder %s37, 1
      %p524 = por %p522, %p523
      %p525 = scmp.ne.s32.totalorder %s517, %s520
      %p526 = scmp.eq.s32.totalorder %s37, 0
      %p527 = por %p525, %p526
      %p528 = scmp.ne.s32.totalorder %s517, %s520
      %p529 = scmp.eq.s32.totalorder %s42, 1
      %p530 = por %p528, %p529
      %p531 = scmp.ne.s32.totalorder %s520, %s521
      %p532 = scmp.eq.s32.totalorder %s42, 0
      %p533 = por %p531, %p532
      %p534 = scmp.ne.s32.totalorder %s520, %s521
      %p535 = scmp.eq.s32.totalorder %s43, 1
      %p536 = por %p534, %p535
      %p538 = scmp.ne.s32.totalorder %s521, %s537
      %p539 = scmp.eq.s32.totalorder %s43, 0
      %p540 = por %p538, %p539
      %p541 = scmp.le.s32.totalorder 1, %s37
      %p542 = scmp.lt.s32.totalorder %s37, 3
      %p543 = pnand %p541, %p542
      %p544 = pneg %p543
      // Predicated region
      $region9: #{tpu_custom_call.1} parent=5 // pred_check
        _
      $region10: #{tpu_custom_call.1} parent=5 // pred_check_branch
        %546 = sbr.rel (%p543) target = $region12
      $region11: #{tpu_custom_call.1} parent=5 // pred_region
        %s547 = ssub.s32 %s37, 1
        // Predicated region
        $region13: #{tpu_custom_call.1} parent=11 // pred_check
          %p548 = pneg %p211
        $region14: #{tpu_custom_call.1} parent=11 // pred_check_branch
          %550 = sbr.rel (%p548) target = $region16
        $region15: #{tpu_custom_call.1} parent=11 // pred_region
          %552 = vsyncadd [#allocation8], 0
          %s553 = smul.addr %s47, 8
          %s554 = scalar_lea.hbm %s5, %s553
          %s556 = sshll.u32 %s554, 4
          %s557 = int_to_ptr.hbm [resolvable:$true] %s556
          %s558 = sshll.u32 [#allocation9], 4
          %s559 = int_to_ptr.vmem [resolvable:$true] %s558
          %561 = dma.hbm_to_vmem [thread:$0]  %s557, 128, %s559, [#allocation8]
        $region16: #{tpu_custom_call.1} parent=11 // pred_fallthru
          _
        // Predicated region
        $region17: #{tpu_custom_call.1} parent=11 // pred_check
          %p562 = pneg %p232
        $region18: #{tpu_custom_call.1} parent=11 // pred_check_branch
          %564 = sbr.rel (%p562) target = $region20
        $region19: #{tpu_custom_call.1} parent=11 // pred_region
          %566 = vsyncadd [#allocation11], 0
          %s567 = sshll.u32 %s6, 4
          %s568 = int_to_ptr.hbm [resolvable:$true] %s567
          %s569 = sshll.u32 [#allocation10], 4
          %s570 = int_to_ptr.vmem [resolvable:$true] %s569
          %575 = dma.hbm_to_vmem [thread:$0]  %s568, 256, %s570, [#allocation11], 64, 64, 4
        $region20: #{tpu_custom_call.1} parent=11 // pred_fallthru
          _
        // Predicated region
        $region21: #{tpu_custom_call.1} parent=11 // pred_check
          %p576 = pneg %p253
        $region22: #{tpu_custom_call.1} parent=11 // pred_check_branch
          %578 = sbr.rel (%p576) target = $region24
        $region23: #{tpu_custom_call.1} parent=11 // pred_region
          %580 = vsyncadd [#allocation11], 0
          %s581 = sshll.u32 %s7, 4
          %s582 = int_to_ptr.hbm [resolvable:$true] %s581
          %s583 = sshll.u32 [#allocation12], 4
          %s584 = int_to_ptr.vmem [resolvable:$true] %s583
          %589 = dma.hbm_to_vmem [thread:$0]  %s582, 256, %s584, [#allocation11], 64, 64, 4
        $region24: #{tpu_custom_call.1} parent=11 // pred_fallthru
          _
        // Predicated region
        $region25: #{tpu_custom_call.1} parent=11 // pred_check
          %p590 = pneg %p274
        $region26: #{tpu_custom_call.1} parent=11 // pred_check_branch
          %592 = sbr.rel (%p590) target = $region28
        $region27: #{tpu_custom_call.1} parent=11 // pred_region
          _
        $region28: #{tpu_custom_call.1} parent=11 // pred_fallthru
          _
        // Predicated region
        $region29: #{tpu_custom_call.1} parent=11 // pred_check
          %p593 = pneg %p295
        $region30: #{tpu_custom_call.1} parent=11 // pred_check_branch
          %595 = sbr.rel (%p593) target = $region32
        $region31: #{tpu_custom_call.1} parent=11 // pred_region
          _
        $region32: #{tpu_custom_call.1} parent=11 // pred_fallthru
          _
        // Predicated region
        $region33: #{tpu_custom_call.1} parent=11 // pred_check
          %p596 = pneg %p316
        $region34: #{tpu_custom_call.1} parent=11 // pred_check_branch
          %598 = sbr.rel (%p596) target = $region36
        $region35: #{tpu_custom_call.1} parent=11 // pred_region
          %600 = vsyncadd [#allocation14], 0
          %s601 = sshll.u32 %s10, 4
          %s602 = int_to_ptr.hbm [resolvable:$true] %s601
          %s603 = sshll.u32 [#allocation13], 4
          %s604 = int_to_ptr.vmem [resolvable:$true] %s603
          %609 = dma.hbm_to_vmem [thread:$0]  %s602, 256, %s604, [#allocation14], 64, 64, 4
        $region36: #{tpu_custom_call.1} parent=11 // pred_fallthru
          _
        // Predicated region
        $region37: #{tpu_custom_call.1} parent=11 // pred_check
          %p610 = pneg %p337
        $region38: #{tpu_custom_call.1} parent=11 // pred_check_branch
          %612 = sbr.rel (%p610) target = $region40
        $region39: #{tpu_custom_call.1} parent=11 // pred_region
          _
        $region40: #{tpu_custom_call.1} parent=11 // pred_fallthru
          _
        // Predicated region
        $region41: #{tpu_custom_call.1} parent=11 // pred_check
          %p613 = pneg %p358
        $region42: #{tpu_custom_call.1} parent=11 // pred_check_branch
          %615 = sbr.rel (%p613) target = $region44
        $region43: #{tpu_custom_call.1} parent=11 // pred_region
          _
        $region44: #{tpu_custom_call.1} parent=11 // pred_fallthru
          _
        // Predicated region
        $region45: #{tpu_custom_call.1} parent=11 // pred_check
          %p616 = pneg %p379
        $region46: #{tpu_custom_call.1} parent=11 // pred_check_branch
          %618 = sbr.rel (%p616) target = $region48
        $region47: #{tpu_custom_call.1} parent=11 // pred_region
          _
        $region48: #{tpu_custom_call.1} parent=11 // pred_fallthru
          _
        // Predicated region
        $region49: #{tpu_custom_call.1} parent=11 // pred_check
          %p619 = pneg %p400
        $region50: #{tpu_custom_call.1} parent=11 // pred_check_branch
          %621 = sbr.rel (%p619) target = $region52
        $region51: #{tpu_custom_call.1} parent=11 // pred_region
          %623 = vsyncadd [#allocation14], 0
          %s624 = sshll.u32 %s14, 4
          %s625 = int_to_ptr.hbm [resolvable:$true] %s624
          %s626 = sshll.u32 [#allocation15], 4
          %s627 = int_to_ptr.vmem [resolvable:$true] %s626
          %632 = dma.hbm_to_vmem [thread:$0]  %s625, 256, %s627, [#allocation14], 64, 64, 4
        $region52: #{tpu_custom_call.1} parent=11 // pred_fallthru
          _
        // Predicated region
        $region53: #{tpu_custom_call.1} parent=11 // pred_check
          %p633 = pneg %p421
        $region54: #{tpu_custom_call.1} parent=11 // pred_check_branch
          %635 = sbr.rel (%p633) target = $region56
        $region55: #{tpu_custom_call.1} parent=11 // pred_region
          _
        $region56: #{tpu_custom_call.1} parent=11 // pred_fallthru
          _
        // Predicated region
        $region57: #{tpu_custom_call.1} parent=11 // pred_check
          %p636 = pneg %p442
        $region58: #{tpu_custom_call.1} parent=11 // pred_check_branch
          %638 = sbr.rel (%p636) target = $region60
        $region59: #{tpu_custom_call.1} parent=11 // pred_region
          _
        $region60: #{tpu_custom_call.1} parent=11 // pred_fallthru
          _
        // Predicated region
        $region61: #{tpu_custom_call.1} parent=11 // pred_check
          %p639 = pneg %p463
        $region62: #{tpu_custom_call.1} parent=11 // pred_check_branch
          %641 = sbr.rel (%p639) target = $region64
        $region63: #{tpu_custom_call.1} parent=11 // pred_region
          _
        $region64: #{tpu_custom_call.1} parent=11 // pred_fallthru
          _
        // Predicated region
        $region65: #{tpu_custom_call.1} parent=11 // pred_check
          %p642 = pneg %p484
        $region66: #{tpu_custom_call.1} parent=11 // pred_check_branch
          %644 = sbr.rel (%p642) target = $region68
        $region67: #{tpu_custom_call.1} parent=11 // pred_region
          _
        $region68: #{tpu_custom_call.1} parent=11 // pred_fallthru
          _
        // Predicated region
        $region69: #{tpu_custom_call.1} parent=11 // pred_check
          %p645 = pneg %p505
        $region70: #{tpu_custom_call.1} parent=11 // pred_check_branch
          %647 = sbr.rel (%p645) target = $region72
        $region71: #{tpu_custom_call.1} parent=11 // pred_region
          _
        $region72: #{tpu_custom_call.1} parent=11 // pred_fallthru
          _
      $region12: #{tpu_custom_call.1} parent=5 // pred_fallthru
        _
      %p648 = scmp.lt.s32.totalorder %s37, 2
      // Predicated region
      $region73: #{tpu_custom_call.1} parent=5 // pred_check
        %p649 = pneg %p648
      $region74: #{tpu_custom_call.1} parent=5 // pred_check_branch
        %651 = sbr.rel (%p649) target = $region76
      $region75: #{tpu_custom_call.1} parent=5 // pred_region
        // Predicated region
        $region77: #{tpu_custom_call.1} parent=75 // pred_check
          %p652 = pneg %p71
        $region78: #{tpu_custom_call.1} parent=75 // pred_check_branch
          %654 = sbr.rel (%p652) target = $region80
        $region79: #{tpu_custom_call.1} parent=75 // pred_region
          %p655 = scmp.lt.s32.totalorder %s44, 1
          %s656 = scalar_select %p655, %s44, 1
          %p657 = scmp.lt.s32.totalorder %s45, 0
          %s658 = scalar_select %p657, %s45, 0
          %s659 = sadd.s32 %s658, %s656
          %s660 = smul.addr %s659, 8
          %s661 = scalar_lea.vmem %s0, %s660
        $region80: #{tpu_custom_call.1} parent=75 // pred_fallthru
          _
        // Predicated region
        $region81: #{tpu_custom_call.1} parent=75 // pred_check
          %p662 = pneg %p97
        $region82: #{tpu_custom_call.1} parent=75 // pred_check_branch
          %664 = sbr.rel (%p662) target = $region84
        $region83: #{tpu_custom_call.1} parent=75 // pred_region
          %p665 = scmp.lt.s32.totalorder %s44, 1
          %s666 = scalar_select %p665, %s44, 1
          %s667 = smul.addr %s666, 8
          %s668 = scalar_lea.vmem %s1, %s667
        $region84: #{tpu_custom_call.1} parent=75 // pred_fallthru
          _
        // Predicated region
        $region85: #{tpu_custom_call.1} parent=75 // pred_check
          %p669 = pneg %p123
        $region86: #{tpu_custom_call.1} parent=75 // pred_check_branch
          %671 = sbr.rel (%p669) target = $region88
        $region87: #{tpu_custom_call.1} parent=75 // pred_region
          %p672 = scmp.lt.s32.totalorder %s44, 1
          %s673 = scalar_select %p672, %s44, 1
          %s674 = smul.addr %s673, 8
          %s675 = scalar_lea.vmem %s2, %s674
        $region88: #{tpu_custom_call.1} parent=75 // pred_fallthru
          _
        // Predicated region
        $region89: #{tpu_custom_call.1} parent=75 // pred_check
          %p676 = pneg %p151
        $region90: #{tpu_custom_call.1} parent=75 // pred_check_branch
          %678 = sbr.rel (%p676) target = $region92
        $region91: #{tpu_custom_call.1} parent=75 // pred_region
          %s679 = sand.u32 %s141, 1
          %s680 = scalar_lea.sflag [#allocation5], %s679
          %s681 = sand.u32 %s141, 1
          %s682 = smul.addr %s681, 8
          %s683 = scalar_lea.vmem [#allocation4], %s682
          %685 = vsyncadd %s680, 0
          %s686 = sadd.s32 %s45, %s44
          %s687 = smul.addr %s686, 8
          %s688 = scalar_lea.hbm %s3, %s687
          %s690 = sshll.u32 %s688, 4
          %s691 = int_to_ptr.hbm [resolvable:$true] %s690
          %s692 = sshll.u32 %s683, 4
          %s693 = int_to_ptr.vmem [resolvable:$true] %s692
          %695 = dma.hbm_to_vmem [thread:$0]  %s691, 128, %s693, %s680
        $region92: #{tpu_custom_call.1} parent=75 // pred_fallthru
          _
        // Predicated region
        $region93: #{tpu_custom_call.1} parent=75 // pred_check
          %p696 = pneg %p179
        $region94: #{tpu_custom_call.1} parent=75 // pred_check_branch
          %698 = sbr.rel (%p696) target = $region96
        $region95: #{tpu_custom_call.1} parent=75 // pred_region
          %s699 = sand.u32 %s37, 1
          %s700 = scalar_lea.sflag [#allocation8], %s699
          %s701 = sand.u32 %s169, 1
          %s702 = smul.addr %s701, 8
          %s703 = scalar_lea.vmem [#allocation7], %s702
          %705 = vsyncadd %s700, 0
          %s706 = sadd.s32 %s45, %s44
          %s707 = smul.addr %s706, 8
          %s708 = scalar_lea.hbm %s4, %s707
          %s710 = sshll.u32 %s708, 4
          %s711 = int_to_ptr.hbm [resolvable:$true] %s710
          %s712 = sshll.u32 %s703, 4
          %s713 = int_to_ptr.vmem [resolvable:$true] %s712
          %715 = dma.hbm_to_vmem [thread:$0]  %s711, 128, %s713, %s700
        $region96: #{tpu_custom_call.1} parent=75 // pred_fallthru
          _
      $region76: #{tpu_custom_call.1} parent=5 // pred_fallthru
        _
      %p716 = scmp.le.s32.totalorder 1, %s37
      %p717 = scmp.lt.s32.totalorder %s37, 3
      %p718 = pnand %p716, %p717
      %p719 = pneg %p718
      // Predicated region
      $region97: #{tpu_custom_call.1} parent=5 // pred_check
        _
      $region98: #{tpu_custom_call.1} parent=5 // pred_check_branch
        %721 = sbr.rel (%p718) target = $region100
      $region99: #{tpu_custom_call.1} parent=5 // pred_region
        %s722 = ssub.s32 %s37, 1
        %s723 = sand.u32 %s144, 1
        %s724 = scalar_lea.sflag [#allocation5], %s723
        %s725 = sand.u32 %s144, 1
        %s726 = smul.addr %s725, 8
        %s727 = scalar_lea.vmem [#allocation4], %s726
        // Predicated region
        $region101: #{tpu_custom_call.1} parent=99 // pred_check
          %p728 = pneg %p157
        $region102: #{tpu_custom_call.1} parent=99 // pred_check_branch
          %730 = sbr.rel (%p728) target = $region104
        $region103: #{tpu_custom_call.1} parent=99 // pred_region
          %732 = dma.done %s724, 128
        $region104: #{tpu_custom_call.1} parent=99 // pred_fallthru
          _
        %s733 = sand.u32 %s42, 1
        %s734 = scalar_lea.sflag [#allocation8], %s733
        %s735 = sand.u32 %s172, 1
        %s736 = smul.addr %s735, 8
        %s737 = scalar_lea.vmem [#allocation7], %s736
        // Predicated region
        $region105: #{tpu_custom_call.1} parent=99 // pred_check
          %p738 = pneg %p185
        $region106: #{tpu_custom_call.1} parent=99 // pred_check_branch
          %740 = sbr.rel (%p738) target = $region108
        $region107: #{tpu_custom_call.1} parent=99 // pred_region
          %742 = dma.done %s734, 128
        $region108: #{tpu_custom_call.1} parent=99 // pred_fallthru
          _
        // Predicated region
        $region109: #{tpu_custom_call.1} parent=99 // pred_check
          %p743 = pneg %p211
        $region110: #{tpu_custom_call.1} parent=99 // pred_check_branch
          %745 = sbr.rel (%p743) target = $region112
        $region111: #{tpu_custom_call.1} parent=99 // pred_region
          %747 = dma.done [#allocation8], 128
        $region112: #{tpu_custom_call.1} parent=99 // pred_fallthru
          _
        // Predicated region
        $region113: #{tpu_custom_call.1} parent=99 // pred_check
          %p748 = pneg %p232
        $region114: #{tpu_custom_call.1} parent=99 // pred_check_branch
          %750 = sbr.rel (%p748) target = $region116
        $region115: #{tpu_custom_call.1} parent=99 // pred_region
          %752 = dma.done [#allocation11], 256
        $region116: #{tpu_custom_call.1} parent=99 // pred_fallthru
          _
        // Predicated region
        $region117: #{tpu_custom_call.1} parent=99 // pred_check
          %p753 = pneg %p253
        $region118: #{tpu_custom_call.1} parent=99 // pred_check_branch
          %755 = sbr.rel (%p753) target = $region120
        $region119: #{tpu_custom_call.1} parent=99 // pred_region
          %757 = dma.done [#allocation11], 256
        $region120: #{tpu_custom_call.1} parent=99 // pred_fallthru
          _
        // Predicated region
        $region121: #{tpu_custom_call.1} parent=99 // pred_check
          %p758 = pneg %p316
        $region122: #{tpu_custom_call.1} parent=99 // pred_check_branch
          %760 = sbr.rel (%p758) target = $region124
        $region123: #{tpu_custom_call.1} parent=99 // pred_region
          %762 = dma.done [#allocation14], 256
        $region124: #{tpu_custom_call.1} parent=99 // pred_fallthru
          _
        // Predicated region
        $region125: #{tpu_custom_call.1} parent=99 // pred_check
          %p763 = pneg %p400
        $region126: #{tpu_custom_call.1} parent=99 // pred_check_branch
          %765 = sbr.rel (%p763) target = $region128
        $region127: #{tpu_custom_call.1} parent=99 // pred_region
          %767 = dma.done [#allocation14], 256
        $region128: #{tpu_custom_call.1} parent=99 // pred_fallthru
          _
        %p768 = scmp.lt.s32.totalorder %s46, 1
        %s769 = scalar_select %p768, %s46, 1
        %p770 = scmp.lt.s32.totalorder %s47, 0
        %s771 = scalar_select %p770, %s47, 0
        %s772 = sadd.s32 %s771, %s769
        %s773 = smul.addr %s772, 8
        %s774 = scalar_lea.vmem %s0, %s773
        %p775 = pneg %p77
        %p776 = pneg %p74
        %p777 = scmp.lt.s32.totalorder %s46, 1
        %s778 = scalar_select %p777, %s46, 1
        %s779 = smul.addr %s778, 8
        %s780 = scalar_lea.vmem %s1, %s779
        %p781 = pneg %p103
        %p782 = pneg %p100
        %p783 = scmp.lt.s32.totalorder %s46, 1
        %s784 = scalar_select %p783, %s46, 1
        %s785 = smul.addr %s784, 8
        %s786 = scalar_lea.vmem %s2, %s785
        %p787 = pneg %p129
        %p788 = pneg %p126
        %s789 = sand.u32 %s144, 1
        %s790 = scalar_lea.sflag [#allocation5], %s789
        %s791 = sand.u32 %s144, 1
        %s792 = smul.addr %s791, 8
        %s793 = scalar_lea.vmem [#allocation4], %s792
        %p794 = pneg %p157
        %p795 = pneg %p154
        %s796 = sand.u32 %s42, 1
        %s797 = scalar_lea.sflag [#allocation8], %s796
        %s798 = sand.u32 %s172, 1
        %s799 = smul.addr %s798, 8
        %s800 = scalar_lea.vmem [#allocation7], %s799
        %p801 = pneg %p185
        %p802 = pneg %p182
        %p803 = pneg %p211
        %p804 = pneg %p208
        %p805 = pneg %p232
        %p806 = pneg %p229
        %p807 = pneg %p253
        %p808 = pneg %p250
        %p809 = pneg %p274
        %p810 = pneg %p271
        %p811 = pneg %p295
        %p812 = pneg %p292
        %p813 = pneg %p316
        %p814 = pneg %p313
        %p815 = pneg %p337
        %p816 = pneg %p334
        %p817 = pneg %p358
        %p818 = pneg %p355
        %p819 = pneg %p379
        %p820 = pneg %p376
        %p821 = pneg %p400
        %p822 = pneg %p397
        %p823 = pneg %p421
        %p824 = pneg %p418
        %p825 = pneg %p442
        %p826 = pneg %p439
        %p827 = pneg %p463
        %p828 = pneg %p460
        %p829 = pneg %p484
        %p830 = pneg %p481
        %p831 = pneg %p505
        %p832 = pneg %p502
        %p833 = pneg %p533
        %p834 = pneg %p530
        %s835 = sand.u32 %s520, 1
        %s836 = scalar_lea.sflag [#allocation6], %s835
        %s837 = sand.u32 %s520, 1
        %s838 = smul.addr %s837, 8
        %s839 = scalar_lea.vmem [#allocation16], %s838
        %p840 = scmp.lt.s32.totalorder %s46, 1
        %s841 = scalar_select %p840, %s46, 1
        %p842 = scmp.lt.s32.totalorder %s47, 0
        %s843 = scalar_select %p842, %s47, 0
        %s844 = sadd.s32 %s843, %s841
        %s845 = smul.addr %s844, 8
        %s846 = scalar_lea.vmem %s0, %s845
        %p847 = scmp.lt.s32.totalorder %s46, 1
        %s848 = scalar_select %p847, %s46, 1
        %s849 = smul.addr %s848, 8
        %s850 = scalar_lea.vmem %s1, %s849
        %p851 = scmp.lt.s32.totalorder %s46, 1
        %s852 = scalar_select %p851, %s46, 1
        %s853 = smul.addr %s852, 8
        %s854 = scalar_lea.vmem %s2, %s853
        %p856 = scmp.eq.s32.totalorder %s47, 0
        // Predicated region
        $region129: #{tpu_custom_call.1} parent=99 // pred_check
          %p857 = pneg %p856
        $region130: #{tpu_custom_call.1} parent=99 // pred_check_branch
          %859 = sbr.rel (%p857) target = $region132
        $region131: #{tpu_custom_call.1} parent=99 // pred_region
          %v860 = vld [vmem:[%s850] sm:$0xff]
          %v861 = vpack.c.bf16 %v860, %v860
          %v862 = vld [vmem:[#allocation10] sm:$0xf]
          %v863 = vld [vmem:[#allocation10 + $0x4] sm:$0xf]
          %v864 = vld [vmem:[#allocation10 + $0x8] sm:$0xf]
          %v865 = vld [vmem:[#allocation10 + $0xc] sm:$0xf]
          %v866 = vld [vmem:[%s8] sm:$0x1]
          %v868 = vperm.slane %v866, 0
          %v874 = vunpack.c.l.b16 %v862
          %v875 = vunpack.c.l.b16 %v863
          %v876 = vunpack.c.l.b16 %v864
          %v877 = vunpack.c.l.b16 %v865
          %v878 = vpack.c.b16 %v875, %v874
          %v879 = vpack.c.b16 %v877, %v876
          %vm882 = vcmask 261120
          %v884 = vsel %vm882, %v861, 0
          %886 = vmatpush.bf16.msra.mxu0 0
          %887 = vmatpush.bf16.msra.mxu0 0
          %888 = vmatpush.bf16.msra.mxu0 0
          %889 = vmatpush.bf16.msra.mxu0 0
          %890 = vmatpush.bf16.msra.mxu0 0
          %891 = vmatpush.bf16.msra.mxu0 0
          %892 = vmatpush.bf16.msra.mxu0 %v879
          %893 = vmatpush.bf16.msra.mxu0 %v878
          %894 = vmatmul.bf16.gmra.mxu0 %v884
          %v895 = vpop.f32.mrf.mxu0
          %v896 = vadd.f32 %v868, %v895
          %v897 = vpop.f32.mrf.mxu0
          %898 = vdwg.mxu0
          %v899 = vpack.c.bf16 %v896, %v896
          %vm900 = vcmask 257024
          %901 = vst.msk [vmem:[#allocation2] sm:$0xf] %vm900, %v899
          %v902 = vld [vmem:[%s854] sm:$0xff]
          %v903 = vpack.c.bf16 %v902, %v902
          %v904 = vld [vmem:[#allocation12] sm:$0xf]
          %v905 = vld [vmem:[#allocation12 + $0x4] sm:$0xf]
          %v906 = vld [vmem:[#allocation12 + $0x8] sm:$0xf]
          %v907 = vld [vmem:[#allocation12 + $0xc] sm:$0xf]
          %v908 = vld [vmem:[%s9] sm:$0x1]
          %v910 = vperm.slane %v908, 0
          %v916 = vunpack.c.l.b16 %v904
          %v917 = vunpack.c.l.b16 %v905
          %v918 = vunpack.c.l.b16 %v906
          %v919 = vunpack.c.l.b16 %v907
          %v920 = vpack.c.b16 %v917, %v916
          %v921 = vpack.c.b16 %v919, %v918
          %v925 = vsel %vm882, %v903, 0
          %927 = vmatpush.bf16.msra.mxu0 0
          %928 = vmatpush.bf16.msra.mxu0 0
          %929 = vmatpush.bf16.msra.mxu0 0
          %930 = vmatpush.bf16.msra.mxu0 0
          %931 = vmatpush.bf16.msra.mxu0 0
          %932 = vmatpush.bf16.msra.mxu0 0
          %933 = vmatpush.bf16.msra.mxu0 %v921
          %934 = vmatpush.bf16.msra.mxu0 %v920
          %935 = vmatmul.bf16.gmra.mxu0 %v925
          %v936 = vpop.f32.mrf.mxu0
          %v937 = vadd.f32 %v910, %v936
          %v938 = vpop.f32.mrf.mxu0
          %939 = vdwg.mxu0
          %v940 = vpack.c.bf16 %v937, %v937
          %941 = vst.msk [vmem:[#allocation3] sm:$0xf] %vm900, %v940
        $region132: #{tpu_custom_call.1} parent=99 // pred_fallthru
          _
        %v942 = vld [vmem:[%s846] sm:$0xff]
        %v943 = vpack.c.bf16 %v942, %v942
        %v944 = vld [vmem:[#allocation10] sm:$0xf]
        %v945 = vld [vmem:[#allocation10 + $0x4] sm:$0xf]
        %v946 = vld [vmem:[#allocation10 + $0x8] sm:$0xf]
        %v947 = vld [vmem:[#allocation10 + $0xc] sm:$0xf]
        %v948 = vld [vmem:[%s8] sm:$0x1]
        %v950 = vperm.slane %v948, 0
        %v956 = vunpack.c.l.b16 %v944
        %v957 = vunpack.c.l.b16 %v945
        %v958 = vunpack.c.l.b16 %v946
        %v959 = vunpack.c.l.b16 %v947
        %v960 = vpack.c.b16 %v957, %v956
        %v961 = vpack.c.b16 %v959, %v958
        %vm964 = vcmask 261120
        %v966 = vsel %vm964, %v943, 0
        %968 = vmatpush.bf16.msra.mxu0 0
        %969 = vmatpush.bf16.msra.mxu0 0
        %970 = vmatpush.bf16.msra.mxu0 0
        %971 = vmatpush.bf16.msra.mxu0 0
        %972 = vmatpush.bf16.msra.mxu0 0
        %973 = vmatpush.bf16.msra.mxu0 0
        %974 = vmatpush.bf16.msra.mxu0 %v961
        %975 = vmatpush.bf16.msra.mxu0 %v960
        %976 = vmatmul.bf16.gmra.mxu0 %v966
        %v977 = vpop.f32.mrf.mxu0
        %v978 = vadd.f32 %v950, %v977
        %v979 = vpop.f32.mrf.mxu0
        %980 = vdwg.mxu0
        %v981 = vpack.c.bf16 %v978, %v978
        %v982 = vld [vmem:[#allocation2] sm:$0xf]
        %v983 = vld [vmem:[#allocation3] sm:$0xf]
        %v984 = vld [vmem:[#allocation9] sm:$0xff]
        %vm985 = vcmp.eq.f32.partialorder %v984, 0.0
        %v986 = vsel %vm985, -1e+32, 0.0
        %v987 = vld [vmem:[%s727] sm:$0xff]
        %v988 = vld [vmem:[%s737] sm:$0xff]
        %v989 = vmax.f32 %v988, 0.0
        %v990 = vand.u32 2147483647, %v988
        %v991 = vsub.f32 0.0, %v990
        %v992 = vmul.f32 %v991, 1.442695
        %v993 = vpow.pop %v992
        %v994 = vadd.f32 %v993, 1.0
        %v995 = vlog2.pop %v994
        %v996 = vmul.f32 %v995, 0.6931472
        %v997 = vadd.f32 %v989, %v996
        %v998 = vmul.f32 %v997, -1.0
        %vm999 = vcmask 64512
        %v1001 = vsel %vm999, %v981, 0
        %v1004 = vsel %vm999, %v982, 0
        %1006 = vmatpush.bf16.xpose.msra.mxu0 0
        %1007 = vmatpush.bf16.xpose.msra.mxu0 0
        %1008 = vmatpush.bf16.xpose.msra.mxu0 0
        %1009 = vmatpush.bf16.xpose.msra.mxu0 0
        %1010 = vmatpush.bf16.xpose.msra.mxu0 0
        %1011 = vmatpush.bf16.xpose.msra.mxu0 0
        %1012 = vmatpush.bf16.xpose.msra.mxu0 0
        %1013 = vmatpush.bf16.xpose.msra.mxu0 %v1004
        %1014 = vmatmul.bf16.gmra.mxu0 %v1001
        %v1015 = vpop.f32.mrf.mxu0
        %v1016 = vadd.f32 0.0, %v1015
        %v1017 = vpop.f32.mrf.mxu0
        %1018 = vdwg.mxu0
        %v1019 = vmul.f32 %v1016, 0.35355338
        %v1020 = vadd.f32 %v1019, %v986
        %v1021 = vsel %vm999, %v1020, -inf
        %1022 = vmax.xlane.f32.xlu0 %v1021
        %v1023 = vpop.xlane.xlu0 %1022
        %v1024 = vsub.f32 %v1020, %v1023
        %v1025 = vmul.f32 %v1024, 1.442695
        %v1026 = vpow.pop %v1025
        %v1027 = vsel %vm999, %v1026, 0.0
        %1028 = vadd.xlane.f32.xlu0 %v1027
        %v1029 = vpop.xlane.xlu0 %1028
        %v1030 = vrcp.pop %v1029
        %v1031 = vmul.f32 %v1026, %v1030
        %v1032 = vmul.f32 %v1031, %v984
        %v1033 = vsel %vm999, %v1032, 0.0
        %1034 = vadd.xlane.f32.xlu0 %v1033
        %v1035 = vpop.xlane.xlu0 %1034
        %1037 = vrot.lane.b32.xlu0 %v1032, 1
        %v1038 = vpop.permute.xlu0 %1037
        %vm1040 = vcmask 7168
        %v1041 = vsel %vm1040, 0.0, %v1038
        %v1042 = vadd.f32 %v1032, %v1041
        %1044 = vrot.lane.b32.xlu0 %v1042, 2
        %v1045 = vpop.permute.xlu0 %1044
        %vm1047 = vcmask 15360
        %v1048 = vsel %vm1047, 0.0, %v1045
        %v1049 = vadd.f32 %v1042, %v1048
        %1051 = vrot.lane.b32.xlu0 %v1049, 4
        %v1052 = vpop.permute.xlu0 %1051
        %vm1054 = vcmask 31744
        %v1055 = vsel %vm1054, 0.0, %v1052
        %v1056 = vadd.f32 %v1049, %v1055
        %v1057 = vsub.f32 %v1035, %v1056
        %v1058 = vmul.f32 %v1057, %v987
        %v1059 = vmax.f32 %v1058, 0.0
        %v1060 = vrsqrt.pop %v1059
        %v1061 = vmul.f32 %v1060, %v1059
        %v1062 = vmul.f32 %v1061, %v1060
        %v1063 = vmul.f32 0.5, %v1062
        %v1064 = vsub.f32 1.5, %v1063
        %v1065 = vmul.f32 %v1060, %v1064
        %v1066 = vmul.f32 %v1059, %v1065
        %vm1067 = vcmp.eq.f32.partialorder %v1059, inf
        %v1068 = vsel %vm1067, %v1059, %v1066
        %vm1069 = vcmp.eq.f32.partialorder %v1059, 0.0
        %v1070 = vand.u32 %v1059, 2147483648
        %v1071 = vsel %vm1069, %v1070, %v1068
        %v1072 = vmul.f32 %v1071, %v998
        %v1073 = vmul.f32 %v1072, 1.442695
        %v1074 = vpow.pop %v1073
        %v1075 = vmax.f32 %v1074, 1e-05
        %v1076 = vmin.f32 %v1075, 100000.0
        %v1077 = vmul.f32 %v1019, %v1076
        %v1078 = vadd.f32 %v1077, %v986
        %v1079 = vsel %vm999, %v1078, -inf
        %1080 = vmax.xlane.f32.xlu0 %v1079
        %v1081 = vpop.xlane.xlu0 %1080
        %v1082 = vsub.f32 %v1078, %v1081
        %v1083 = vmul.f32 %v1082, 1.442695
        %v1084 = vpow.pop %v1083
        %v1085 = vsel %vm999, %v1084, 0.0
        %1086 = vadd.xlane.f32.xlu0 %v1085
        %v1087 = vpop.xlane.xlu0 %1086
        %v1088 = vrcp.pop %v1087
        %v1089 = vmul.f32 %v1084, %v1088
        %v1090 = vpack.c.bf16 %v1089, %v1089
        %v1092 = vsel %vm999, %v1090, 0
        %vm1094 = vcmask 1043456
        %v1096 = vsel %vm1094, %v983, 0
        %1098 = vmatpush.bf16.msra.mxu0 0
        %1099 = vmatpush.bf16.msra.mxu0 0
        %1100 = vmatpush.bf16.msra.mxu0 0
        %1101 = vmatpush.bf16.msra.mxu0 0
        %1102 = vmatpush.bf16.msra.mxu0 0
        %1103 = vmatpush.bf16.msra.mxu0 0
        %1104 = vmatpush.bf16.msra.mxu0 0
        %1105 = vmatpush.bf16.msra.mxu0 %v1096
        %1106 = vmatmul.bf16.gmra.mxu0 %v1092
        %v1107 = vpop.f32.mrf.mxu0
        %v1108 = vadd.f32 0.0, %v1107
        %v1109 = vpop.f32.mrf.mxu0
        %1110 = vdwg.mxu0
        %v1111 = vpack.c.bf16 %v1108, %v1108
        %v1112 = vld [vmem:[#allocation13] sm:$0xf]
        %v1114 = vunpack.c.l.b16 %v981
        %v1115 = vpack.c.b16 %v1114, %v1114
        %1116 = vrot.lane.b32.xlu0 %v1115, 120
        %v1117 = vpop.permute.xlu0 %1116
        %v1119 = vunpack.c.l.b16 %v982
        %v1120 = vpack.c.b16 %v1119, %v1119
        %1121 = vrot.lane.b32.xlu0 %v1120, 120
        %v1122 = vpop.permute.xlu0 %1121
        %v1124 = vsel %vm999, %v1117, 0
        %v1127 = vsel %vm999, %v1122, 0
        %1129 = vmatpush.bf16.xpose.msra.mxu0 0
        %1130 = vmatpush.bf16.xpose.msra.mxu0 0
        %1131 = vmatpush.bf16.xpose.msra.mxu0 0
        %1132 = vmatpush.bf16.xpose.msra.mxu0 0
        %1133 = vmatpush.bf16.xpose.msra.mxu0 0
        %1134 = vmatpush.bf16.xpose.msra.mxu0 0
        %1135 = vmatpush.bf16.xpose.msra.mxu0 0
        %1136 = vmatpush.bf16.xpose.msra.mxu0 %v1127
        %1137 = vmatmul.bf16.gmra.mxu0 %v1124
        %v1138 = vpop.f32.mrf.mxu0
        %v1139 = vadd.f32 0.0, %v1138
        %v1140 = vpop.f32.mrf.mxu0
        %1141 = vdwg.mxu0
        %v1142 = vmul.f32 %v1139, 0.35355338
        %v1143 = vadd.f32 %v1142, %v986
        %v1144 = vsel %vm999, %v1143, -inf
        %1145 = vmax.xlane.f32.xlu0 %v1144
        %v1146 = vpop.xlane.xlu0 %1145
        %v1147 = vsub.f32 %v1143, %v1146
        %v1148 = vmul.f32 %v1147, 1.442695
        %v1149 = vpow.pop %v1148
        %v1150 = vsel %vm999, %v1149, 0.0
        %1151 = vadd.xlane.f32.xlu0 %v1150
        %v1152 = vpop.xlane.xlu0 %1151
        %v1153 = vrcp.pop %v1152
        %v1154 = vmul.f32 %v1149, %v1153
        %v1155 = vmul.f32 %v1154, %v984
        %v1156 = vsel %vm999, %v1155, 0.0
        %1157 = vadd.xlane.f32.xlu0 %v1156
        %v1158 = vpop.xlane.xlu0 %1157
        %1160 = vrot.lane.b32.xlu0 %v1155, 1
        %v1161 = vpop.permute.xlu0 %1160
        %v1163 = vsel %vm1040, 0.0, %v1161
        %v1164 = vadd.f32 %v1155, %v1163
        %1166 = vrot.lane.b32.xlu0 %v1164, 2
        %v1167 = vpop.permute.xlu0 %1166
        %v1169 = vsel %vm1047, 0.0, %v1167
        %v1170 = vadd.f32 %v1164, %v1169
        %1172 = vrot.lane.b32.xlu0 %v1170, 4
        %v1173 = vpop.permute.xlu0 %1172
        %v1175 = vsel %vm1054, 0.0, %v1173
        %v1176 = vadd.f32 %v1170, %v1175
        %v1177 = vsub.f32 %v1158, %v1176
        %v1178 = vmul.f32 %v1177, %v987
        %v1179 = vmax.f32 %v1178, 0.0
        %v1180 = vrsqrt.pop %v1179
        %v1181 = vmul.f32 %v1180, %v1179
        %v1182 = vmul.f32 %v1181, %v1180
        %v1183 = vmul.f32 0.5, %v1182
        %v1184 = vsub.f32 1.5, %v1183
        %v1185 = vmul.f32 %v1180, %v1184
        %v1186 = vmul.f32 %v1179, %v1185
        %vm1187 = vcmp.eq.f32.partialorder %v1179, inf
        %v1188 = vsel %vm1187, %v1179, %v1186
        %vm1189 = vcmp.eq.f32.partialorder %v1179, 0.0
        %v1190 = vand.u32 %v1179, 2147483648
        %v1191 = vsel %vm1189, %v1190, %v1188
        %v1192 = vmul.f32 %v1191, %v998
        %v1193 = vmul.f32 %v1192, 1.442695
        %v1194 = vpow.pop %v1193
        %v1195 = vmax.f32 %v1194, 1e-05
        %v1196 = vmin.f32 %v1195, 100000.0
        %v1197 = vmul.f32 %v1142, %v1196
        %v1198 = vadd.f32 %v1197, %v986
        %v1199 = vsel %vm999, %v1198, -inf
        %1200 = vmax.xlane.f32.xlu0 %v1199
        %v1201 = vpop.xlane.xlu0 %1200
        %v1202 = vsub.f32 %v1198, %v1201
        %v1203 = vmul.f32 %v1202, 1.442695
        %v1204 = vpow.pop %v1203
        %v1205 = vsel %vm999, %v1204, 0.0
        %1206 = vadd.xlane.f32.xlu0 %v1205
        %v1207 = vpop.xlane.xlu0 %1206
        %v1208 = vrcp.pop %v1207
        %v1209 = vmul.f32 %v1204, %v1208
        %v1210 = vpack.c.bf16 %v1209, %v1209
        %v1212 = vunpack.c.l.b16 %v983
        %v1213 = vpack.c.b16 %v1212, %v1212
        %1214 = vrot.lane.b32.xlu0 %v1213, 120
        %v1215 = vpop.permute.xlu0 %1214
        %v1217 = vsel %vm999, %v1210, 0
        %v1220 = vsel %vm1094, %v1215, 0
        %1222 = vmatpush.bf16.msra.mxu0 0
        %1223 = vmatpush.bf16.msra.mxu0 0
        %1224 = vmatpush.bf16.msra.mxu0 0
        %1225 = vmatpush.bf16.msra.mxu0 0
        %1226 = vmatpush.bf16.msra.mxu0 0
        %1227 = vmatpush.bf16.msra.mxu0 0
        %1228 = vmatpush.bf16.msra.mxu0 0
        %1229 = vmatpush.bf16.msra.mxu0 %v1220
        %1230 = vmatmul.bf16.gmra.mxu0 %v1217
        %v1231 = vpop.f32.mrf.mxu0
        %v1232 = vadd.f32 0.0, %v1231
        %v1233 = vpop.f32.mrf.mxu0
        %1234 = vdwg.mxu0
        %v1235 = vpack.c.bf16 %v1232, %v1232
        %v1236 = vld [vmem:[#allocation13 + $0x4] sm:$0xf]
        %v1238 = vsel %vm999, %v1235, 0
        %v1241 = vsel %vm1094, %v1236, 0
        %1243 = vmatpush.bf16.msra.mxu0 0
        %1244 = vmatpush.bf16.msra.mxu0 0
        %1245 = vmatpush.bf16.msra.mxu0 0
        %1246 = vmatpush.bf16.msra.mxu0 0
        %1247 = vmatpush.bf16.msra.mxu0 0
        %1248 = vmatpush.bf16.msra.mxu0 0
        %1249 = vmatpush.bf16.msra.mxu0 0
        %1250 = vmatpush.bf16.msra.mxu0 %v1241
        %1251 = vmatmul.bf16.gmra.mxu0 %v1238
        %v1252 = vpop.f32.mrf.mxu0
        %v1253 = vadd.f32 0.0, %v1252
        %v1254 = vpop.f32.mrf.mxu0
        %1255 = vdwg.mxu0
        %v1257 = vsel %vm999, %v1111, 0
        %v1260 = vsel %vm1094, %v1112, 0
        %1262 = vmatpush.bf16.msra.mxu0 0
        %1263 = vmatpush.bf16.msra.mxu0 0
        %1264 = vmatpush.bf16.msra.mxu0 0
        %1265 = vmatpush.bf16.msra.mxu0 0
        %1266 = vmatpush.bf16.msra.mxu0 0
        %1267 = vmatpush.bf16.msra.mxu0 0
        %1268 = vmatpush.bf16.msra.mxu0 0
        %1269 = vmatpush.bf16.msra.mxu0 %v1260
        %1270 = vmatmul.bf16.gmra.mxu0 %v1257
        %v1271 = vpop.f32.mrf.mxu0
        %v1272 = vadd.f32 %v1253, %v1271
        %v1273 = vpop.f32.mrf.mxu0
        %1274 = vdwg.mxu0
        %1275 = vrot.lane.b32.xlu0 %v1115, 112
        %v1276 = vpop.permute.xlu0 %1275
        %1277 = vrot.lane.b32.xlu0 %v1120, 112
        %v1278 = vpop.permute.xlu0 %1277
        %v1280 = vsel %vm999, %v1276, 0
        %v1283 = vsel %vm999, %v1278, 0
        %1285 = vmatpush.bf16.xpose.msra.mxu0 0
        %1286 = vmatpush.bf16.xpose.msra.mxu0 0
        %1287 = vmatpush.bf16.xpose.msra.mxu0 0
        %1288 = vmatpush.bf16.xpose.msra.mxu0 0
        %1289 = vmatpush.bf16.xpose.msra.mxu0 0
        %1290 = vmatpush.bf16.xpose.msra.mxu0 0
        %1291 = vmatpush.bf16.xpose.msra.mxu0 0
        %1292 = vmatpush.bf16.xpose.msra.mxu0 %v1283
        %1293 = vmatmul.bf16.gmra.mxu0 %v1280
        %v1294 = vpop.f32.mrf.mxu0
        %v1295 = vadd.f32 0.0, %v1294
        %v1296 = vpop.f32.mrf.mxu0
        %1297 = vdwg.mxu0
        %v1298 = vmul.f32 %v1295, 0.35355338
        %v1299 = vadd.f32 %v1298, %v986
        %v1300 = vsel %vm999, %v1299, -inf
        %1301 = vmax.xlane.f32.xlu0 %v1300
        %v1302 = vpop.xlane.xlu0 %1301
        %v1303 = vsub.f32 %v1299, %v1302
        %v1304 = vmul.f32 %v1303, 1.442695
        %v1305 = vpow.pop %v1304
        %v1306 = vsel %vm999, %v1305, 0.0
        %1307 = vadd.xlane.f32.xlu0 %v1306
        %v1308 = vpop.xlane.xlu0 %1307
        %v1309 = vrcp.pop %v1308
        %v1310 = vmul.f32 %v1305, %v1309
        %v1311 = vmul.f32 %v1310, %v984
        %v1312 = vsel %vm999, %v1311, 0.0
        %1313 = vadd.xlane.f32.xlu0 %v1312
        %v1314 = vpop.xlane.xlu0 %1313
        %1316 = vrot.lane.b32.xlu0 %v1311, 1
        %v1317 = vpop.permute.xlu0 %1316
        %v1319 = vsel %vm1040, 0.0, %v1317
        %v1320 = vadd.f32 %v1311, %v1319
        %1322 = vrot.lane.b32.xlu0 %v1320, 2
        %v1323 = vpop.permute.xlu0 %1322
        %v1325 = vsel %vm1047, 0.0, %v1323
        %v1326 = vadd.f32 %v1320, %v1325
        %1328 = vrot.lane.b32.xlu0 %v1326, 4
        %v1329 = vpop.permute.xlu0 %1328
        %v1331 = vsel %vm1054, 0.0, %v1329
        %v1332 = vadd.f32 %v1326, %v1331
        %v1333 = vsub.f32 %v1314, %v1332
        %v1334 = vmul.f32 %v1333, %v987
        %v1335 = vmax.f32 %v1334, 0.0
        %v1336 = vrsqrt.pop %v1335
        %v1337 = vmul.f32 %v1336, %v1335
        %v1338 = vmul.f32 %v1337, %v1336
        %v1339 = vmul.f32 0.5, %v1338
        %v1340 = vsub.f32 1.5, %v1339
        %v1341 = vmul.f32 %v1336, %v1340
        %v1342 = vmul.f32 %v1335, %v1341
        %vm1343 = vcmp.eq.f32.partialorder %v1335, inf
        %v1344 = vsel %vm1343, %v1335, %v1342
        %vm1345 = vcmp.eq.f32.partialorder %v1335, 0.0
        %v1346 = vand.u32 %v1335, 2147483648
        %v1347 = vsel %vm1345, %v1346, %v1344
        %v1348 = vmul.f32 %v1347, %v998
        %v1349 = vmul.f32 %v1348, 1.442695
        %v1350 = vpow.pop %v1349
        %v1351 = vmax.f32 %v1350, 1e-05
        %v1352 = vmin.f32 %v1351, 100000.0
        %v1353 = vmul.f32 %v1298, %v1352
        %v1354 = vadd.f32 %v1353, %v986
        %v1355 = vsel %vm999, %v1354, -inf
        %1356 = vmax.xlane.f32.xlu0 %v1355
        %v1357 = vpop.xlane.xlu0 %1356
        %v1358 = vsub.f32 %v1354, %v1357
        %v1359 = vmul.f32 %v1358, 1.442695
        %v1360 = vpow.pop %v1359
        %v1361 = vsel %vm999, %v1360, 0.0
        %1362 = vadd.xlane.f32.xlu0 %v1361
        %v1363 = vpop.xlane.xlu0 %1362
        %v1364 = vrcp.pop %v1363
        %v1365 = vmul.f32 %v1360, %v1364
        %v1366 = vpack.c.bf16 %v1365, %v1365
        %1367 = vrot.lane.b32.xlu0 %v1213, 112
        %v1368 = vpop.permute.xlu0 %1367
        %v1370 = vsel %vm999, %v1366, 0
        %v1373 = vsel %vm1094, %v1368, 0
        %1375 = vmatpush.bf16.msra.mxu0 0
        %1376 = vmatpush.bf16.msra.mxu0 0
        %1377 = vmatpush.bf16.msra.mxu0 0
        %1378 = vmatpush.bf16.msra.mxu0 0
        %1379 = vmatpush.bf16.msra.mxu0 0
        %1380 = vmatpush.bf16.msra.mxu0 0
        %1381 = vmatpush.bf16.msra.mxu0 0
        %1382 = vmatpush.bf16.msra.mxu0 %v1373
        %1383 = vmatmul.bf16.gmra.mxu0 %v1370
        %v1384 = vpop.f32.mrf.mxu0
        %v1385 = vadd.f32 0.0, %v1384
        %v1386 = vpop.f32.mrf.mxu0
        %1387 = vdwg.mxu0
        %v1388 = vpack.c.bf16 %v1385, %v1385
        %v1389 = vld [vmem:[#allocation13 + $0x8] sm:$0xf]
        %v1391 = vsel %vm999, %v1388, 0
        %v1394 = vsel %vm1094, %v1389, 0
        %1396 = vmatpush.bf16.msra.mxu0 0
        %1397 = vmatpush.bf16.msra.mxu0 0
        %1398 = vmatpush.bf16.msra.mxu0 0
        %1399 = vmatpush.bf16.msra.mxu0 0
        %1400 = vmatpush.bf16.msra.mxu0 0
        %1401 = vmatpush.bf16.msra.mxu0 0
        %1402 = vmatpush.bf16.msra.mxu0 0
        %1403 = vmatpush.bf16.msra.mxu0 %v1394
        %1404 = vmatmul.bf16.gmra.mxu0 %v1391
        %v1405 = vpop.f32.mrf.mxu0
        %v1406 = vadd.f32 0.0, %v1405
        %v1407 = vpop.f32.mrf.mxu0
        %1408 = vdwg.mxu0
        %v1409 = vadd.f32 %v1272, %v1406
        %1410 = vrot.lane.b32.xlu0 %v1115, 104
        %v1411 = vpop.permute.xlu0 %1410
        %1412 = vrot.lane.b32.xlu0 %v1120, 104
        %v1413 = vpop.permute.xlu0 %1412
        %v1415 = vsel %vm999, %v1411, 0
        %v1418 = vsel %vm999, %v1413, 0
        %1420 = vmatpush.bf16.xpose.msra.mxu0 0
        %1421 = vmatpush.bf16.xpose.msra.mxu0 0
        %1422 = vmatpush.bf16.xpose.msra.mxu0 0
        %1423 = vmatpush.bf16.xpose.msra.mxu0 0
        %1424 = vmatpush.bf16.xpose.msra.mxu0 0
        %1425 = vmatpush.bf16.xpose.msra.mxu0 0
        %1426 = vmatpush.bf16.xpose.msra.mxu0 0
        %1427 = vmatpush.bf16.xpose.msra.mxu0 %v1418
        %1428 = vmatmul.bf16.gmra.mxu0 %v1415
        %v1429 = vpop.f32.mrf.mxu0
        %v1430 = vadd.f32 0.0, %v1429
        %v1431 = vpop.f32.mrf.mxu0
        %1432 = vdwg.mxu0
        %v1433 = vmul.f32 %v1430, 0.35355338
        %v1434 = vadd.f32 %v1433, %v986
        %v1435 = vsel %vm999, %v1434, -inf
        %1436 = vmax.xlane.f32.xlu0 %v1435
        %v1437 = vpop.xlane.xlu0 %1436
        %v1438 = vsub.f32 %v1434, %v1437
        %v1439 = vmul.f32 %v1438, 1.442695
        %v1440 = vpow.pop %v1439
        %v1441 = vsel %vm999, %v1440, 0.0
        %1442 = vadd.xlane.f32.xlu0 %v1441
        %v1443 = vpop.xlane.xlu0 %1442
        %v1444 = vrcp.pop %v1443
        %v1445 = vmul.f32 %v1440, %v1444
        %v1446 = vmul.f32 %v1445, %v984
        %v1447 = vsel %vm999, %v1446, 0.0
        %1448 = vadd.xlane.f32.xlu0 %v1447
        %v1449 = vpop.xlane.xlu0 %1448
        %1451 = vrot.lane.b32.xlu0 %v1446, 1
        %v1452 = vpop.permute.xlu0 %1451
        %v1454 = vsel %vm1040, 0.0, %v1452
        %v1455 = vadd.f32 %v1446, %v1454
        %1457 = vrot.lane.b32.xlu0 %v1455, 2
        %v1458 = vpop.permute.xlu0 %1457
        %v1460 = vsel %vm1047, 0.0, %v1458
        %v1461 = vadd.f32 %v1455, %v1460
        %1463 = vrot.lane.b32.xlu0 %v1461, 4
        %v1464 = vpop.permute.xlu0 %1463
        %v1466 = vsel %vm1054, 0.0, %v1464
        %v1467 = vadd.f32 %v1461, %v1466
        %v1468 = vsub.f32 %v1449, %v1467
        %v1469 = vmul.f32 %v1468, %v987
        %v1470 = vmax.f32 %v1469, 0.0
        %v1471 = vrsqrt.pop %v1470
        %v1472 = vmul.f32 %v1471, %v1470
        %v1473 = vmul.f32 %v1472, %v1471
        %v1474 = vmul.f32 0.5, %v1473
        %v1475 = vsub.f32 1.5, %v1474
        %v1476 = vmul.f32 %v1471, %v1475
        %v1477 = vmul.f32 %v1470, %v1476
        %vm1478 = vcmp.eq.f32.partialorder %v1470, inf
        %v1479 = vsel %vm1478, %v1470, %v1477
        %vm1480 = vcmp.eq.f32.partialorder %v1470, 0.0
        %v1481 = vand.u32 %v1470, 2147483648
        %v1482 = vsel %vm1480, %v1481, %v1479
        %v1483 = vmul.f32 %v1482, %v998
        %v1484 = vmul.f32 %v1483, 1.442695
        %v1485 = vpow.pop %v1484
        %v1486 = vmax.f32 %v1485, 1e-05
        %v1487 = vmin.f32 %v1486, 100000.0
        %v1488 = vmul.f32 %v1433, %v1487
        %v1489 = vadd.f32 %v1488, %v986
        %v1490 = vsel %vm999, %v1489, -inf
        %1491 = vmax.xlane.f32.xlu0 %v1490
        %v1492 = vpop.xlane.xlu0 %1491
        %v1493 = vsub.f32 %v1489, %v1492
        %v1494 = vmul.f32 %v1493, 1.442695
        %v1495 = vpow.pop %v1494
        %v1496 = vsel %vm999, %v1495, 0.0
        %1497 = vadd.xlane.f32.xlu0 %v1496
        %v1498 = vpop.xlane.xlu0 %1497
        %v1499 = vrcp.pop %v1498
        %v1500 = vmul.f32 %v1495, %v1499
        %v1501 = vpack.c.bf16 %v1500, %v1500
        %1502 = vrot.lane.b32.xlu0 %v1213, 104
        %v1503 = vpop.permute.xlu0 %1502
        %v1505 = vsel %vm999, %v1501, 0
        %v1508 = vsel %vm1094, %v1503, 0
        %1510 = vmatpush.bf16.msra.mxu0 0
        %1511 = vmatpush.bf16.msra.mxu0 0
        %1512 = vmatpush.bf16.msra.mxu0 0
        %1513 = vmatpush.bf16.msra.mxu0 0
        %1514 = vmatpush.bf16.msra.mxu0 0
        %1515 = vmatpush.bf16.msra.mxu0 0
        %1516 = vmatpush.bf16.msra.mxu0 0
        %1517 = vmatpush.bf16.msra.mxu0 %v1508
        %1518 = vmatmul.bf16.gmra.mxu0 %v1505
        %v1519 = vpop.f32.mrf.mxu0
        %v1520 = vadd.f32 0.0, %v1519
        %v1521 = vpop.f32.mrf.mxu0
        %1522 = vdwg.mxu0
        %v1523 = vpack.c.bf16 %v1520, %v1520
        %v1524 = vld [vmem:[#allocation13 + $0xc] sm:$0xf]
        %v1526 = vsel %vm999, %v1523, 0
        %v1529 = vsel %vm1094, %v1524, 0
        %1531 = vmatpush.bf16.msra.mxu0 0
        %1532 = vmatpush.bf16.msra.mxu0 0
        %1533 = vmatpush.bf16.msra.mxu0 0
        %1534 = vmatpush.bf16.msra.mxu0 0
        %1535 = vmatpush.bf16.msra.mxu0 0
        %1536 = vmatpush.bf16.msra.mxu0 0
        %1537 = vmatpush.bf16.msra.mxu0 0
        %1538 = vmatpush.bf16.msra.mxu0 %v1529
        %1539 = vmatmul.bf16.gmra.mxu0 %v1526
        %v1540 = vpop.f32.mrf.mxu0
        %v1541 = vadd.f32 0.0, %v1540
        %v1542 = vpop.f32.mrf.mxu0
        %1543 = vdwg.mxu0
        %v1544 = vadd.f32 %v1409, %v1541
        %v1545 = vlaneseq
        %v1546 = vshrl.u32 %v1545, 7
        %vm1547 = vcmp.eq.s32.totalorder %v1546, 0
        %s1548 = scalar_select %p856, 1, 0
        %v1549 = vstv %s1548
        %vm1550 = vcmp.eq.s32.totalorder %v1549, 1
        %vm1551 = vmand %vm1547, %vm1550
        %v1552 = vsel %vm1551, 1, 0
        %vm1553 = vcmp.eq.s32.totalorder %v1552, 1
        %v1554 = vsel %vm1553, 0.0, %v1544
        %v1555 = vadd.f32 %v942, %v1554
        %v1556 = vld [vmem:[%s11] sm:$0x1]
        %v1558 = vperm.slane %v1556, 0
        %v1560 = vadd.f32 %v1555, %v1558
        %v1561 = vsel %vm964, %v1560, 0.0
        %1562 = vadd.xlane.f32.xlu0 %v1561
        %v1563 = vpop.xlane.xlu0 %1562
        %v1564 = vrcp.pop 32.0
        %v1565 = vmul.f32 32.0, %v1564
        %v1566 = vsub.f32 1.0, %v1565
        %v1567 = vmul.f32 %v1564, %v1566
        %v1568 = vadd.f32 %v1564, %v1567
        %vm1569 = vweird.f32 %v1564
        %v1570 = vsel %vm1569, %v1564, %v1568
        %v1571 = vmul.f32 %v1563, %v1570
        %v1572 = vsub.f32 %v1560, %v1571
        %v1573 = vmul.f32 %v1572, %v1572
        %v1574 = vsel %vm964, %v1573, 0.0
        %1575 = vadd.xlane.f32.xlu0 %v1574
        %v1576 = vpop.xlane.xlu0 %1575
        %v1577 = vmul.f32 %v1576, %v1570
        %v1578 = vadd.f32 %v1577, 1e-05
        %v1579 = vrsqrt.pop %v1578
        %v1580 = vmul.f32 %v1579, %v1578
        %v1581 = vmul.f32 %v1580, %v1579
        %v1582 = vmul.f32 0.5, %v1581
        %v1583 = vsub.f32 1.5, %v1582
        %v1584 = vmul.f32 %v1579, %v1583
        %vm1585 = vweird.f32 %v1578
        %vm1586 = vweird.f32 %v1579
        %vm1587 = vmor %vm1585, %vm1586
        %v1588 = vsel %vm1587, %v1579, %v1584
        %v1589 = vmul.f32 %v1572, %v1588
        %v1590 = vld [vmem:[%s12] sm:$0x1]
        %v1592 = vperm.slane %v1590, 0
        %v1594 = vmul.f32 %v1589, %v1592
        %v1595 = vld [vmem:[%s13] sm:$0x1]
        %v1597 = vperm.slane %v1595, 0
        %v1599 = vadd.f32 %v1594, %v1597
        %v1600 = vpack.c.bf16 %v1599, %v1599
        %v1601 = vld [vmem:[#allocation15] sm:$0xf]
        %v1602 = vld [vmem:[#allocation15 + $0x4] sm:$0xf]
        %v1603 = vld [vmem:[#allocation15 + $0x8] sm:$0xf]
        %v1604 = vld [vmem:[#allocation15 + $0xc] sm:$0xf]
        %v1605 = vld [vmem:[%s15] sm:$0x1]
        %v1607 = vperm.slane %v1605, 0
        %v1613 = vunpack.c.l.b16 %v1601
        %v1614 = vunpack.c.l.b16 %v1602
        %v1615 = vunpack.c.l.b16 %v1603
        %v1616 = vunpack.c.l.b16 %v1604
        %v1617 = vpack.c.b16 %v1614, %v1613
        %v1618 = vpack.c.b16 %v1616, %v1615
        %v1622 = vsel %vm964, %v1600, 0
        %1624 = vmatpush.bf16.msra.mxu0 0
        %1625 = vmatpush.bf16.msra.mxu0 0
        %1626 = vmatpush.bf16.msra.mxu0 0
        %1627 = vmatpush.bf16.msra.mxu0 0
        %1628 = vmatpush.bf16.msra.mxu0 0
        %1629 = vmatpush.bf16.msra.mxu0 0
        %1630 = vmatpush.bf16.msra.mxu0 %v1618
        %1631 = vmatpush.bf16.msra.mxu0 %v1617
        %1632 = vmatmul.bf16.gmra.mxu0 %v1622
        %v1633 = vpop.f32.mrf.mxu0
        %v1634 = vadd.f32 %v1607, %v1633
        %v1635 = vpop.f32.mrf.mxu0
        %1636 = vdwg.mxu0
        %v1637 = vmax.f32 %v1634, 0.0
        %v1638 = vpack.c.bf16 %v1637, %v1637
        %v1639 = vld [vmem:[%s16] sm:$0xf]
        %v1640 = vld [vmem:[%s16 + $0x4] sm:$0xf]
        %v1641 = vld [vmem:[%s16 + $0x8] sm:$0xf]
        %v1642 = vld [vmem:[%s16 + $0xc] sm:$0xf]
        %v1643 = vld [vmem:[%s16 + $0x10] sm:$0xf]
        %v1644 = vld [vmem:[%s16 + $0x14] sm:$0xf]
        %v1645 = vld [vmem:[%s16 + $0x18] sm:$0xf]
        %v1646 = vld [vmem:[%s16 + $0x1c] sm:$0xf]
        %v1647 = vld [vmem:[%s17] sm:$0x1]
        %v1649 = vperm.slane %v1647, 0
        %v1659 = vunpack.c.l.b16 %v1639
        %v1660 = vunpack.c.l.b16 %v1640
        %v1661 = vunpack.c.l.b16 %v1641
        %v1662 = vunpack.c.l.b16 %v1642
        %v1663 = vunpack.c.l.b16 %v1643
        %v1664 = vunpack.c.l.b16 %v1644
        %v1665 = vunpack.c.l.b16 %v1645
        %v1666 = vunpack.c.l.b16 %v1646
        %v1667 = vpack.c.b16 %v1660, %v1659
        %v1668 = vpack.c.b16 %v1662, %v1661
        %v1669 = vpack.c.b16 %v1664, %v1663
        %v1670 = vpack.c.b16 %v1666, %v1665
        %vm1675 = vcmask 523264
        %v1677 = vsel %vm1675, %v1638, 0
        %1679 = vmatpush.bf16.msra.mxu0 0
        %1680 = vmatpush.bf16.msra.mxu0 0
        %1681 = vmatpush.bf16.msra.mxu0 0
        %1682 = vmatpush.bf16.msra.mxu0 0
        %1683 = vmatpush.bf16.msra.mxu0 %v1670
        %1684 = vmatpush.bf16.msra.mxu0 %v1669
        %1685 = vmatpush.bf16.msra.mxu0 %v1668
        %1686 = vmatpush.bf16.msra.mxu0 %v1667
        %1687 = vmatmul.bf16.gmra.mxu0 %v1677
        %v1688 = vpop.f32.mrf.mxu0
        %v1689 = vadd.f32 %v1649, %v1688
        %v1690 = vpop.f32.mrf.mxu0
        %1691 = vdwg.mxu0
        %v1692 = vadd.f32 %v1599, %v1689
        %v1693 = vsel %vm964, %v1692, 0.0
        %1694 = vadd.xlane.f32.xlu0 %v1693
        %v1695 = vpop.xlane.xlu0 %1694
        %v1696 = vmul.f32 %v1695, %v1570
        %v1697 = vsub.f32 %v1692, %v1696
        %v1698 = vmul.f32 %v1697, %v1697
        %v1699 = vsel %vm964, %v1698, 0.0
        %1700 = vadd.xlane.f32.xlu0 %v1699
        %v1701 = vpop.xlane.xlu0 %1700
        %v1702 = vmul.f32 %v1701, %v1570
        %v1703 = vadd.f32 %v1702, 1e-05
        %v1704 = vrsqrt.pop %v1703
        %v1705 = vmul.f32 %v1704, %v1703
        %v1706 = vmul.f32 %v1705, %v1704
        %v1707 = vmul.f32 0.5, %v1706
        %v1708 = vsub.f32 1.5, %v1707
        %v1709 = vmul.f32 %v1704, %v1708
        %vm1710 = vweird.f32 %v1703
        %vm1711 = vweird.f32 %v1704
        %vm1712 = vmor %vm1710, %vm1711
        %v1713 = vsel %vm1712, %v1704, %v1709
        %v1714 = vmul.f32 %v1697, %v1713
        %v1715 = vld [vmem:[%s18] sm:$0x1]
        %v1717 = vperm.slane %v1715, 0
        %v1719 = vmul.f32 %v1714, %v1717
        %v1720 = vld [vmem:[%s19] sm:$0x1]
        %v1722 = vperm.slane %v1720, 0
        %v1724 = vadd.f32 %v1719, %v1722
        %1725 = vst.msk [vmem:[%s839] sm:$0xff] %vm964, %v1724
        %s1726 = sand.u32 %s520, 1
        %s1727 = scalar_lea.sflag [#allocation6], %s1726
        %s1728 = sand.u32 %s520, 1
        %s1729 = smul.addr %s1728, 8
        %s1730 = scalar_lea.vmem [#allocation16], %s1729
        // Predicated region
        $region133: #{tpu_custom_call.1} parent=99 // pred_check
          %p1731 = pneg %p530
        $region134: #{tpu_custom_call.1} parent=99 // pred_check_branch
          %1733 = sbr.rel (%p1731) target = $region136
        $region135: #{tpu_custom_call.1} parent=99 // pred_region
          %1735 = vsyncadd %s1727, 0
          %s1736 = sadd.s32 %s47, %s46
          %s1737 = smul.addr %s1736, 8
          %s1738 = scalar_lea.hbm %s20, %s1737
          %s1740 = sshll.u32 %s1730, 4
          %s1741 = int_to_ptr.vmem [resolvable:$true] %s1740
          %s1742 = sshll.u32 %s1738, 4
          %s1743 = int_to_ptr.hbm [resolvable:$true] %s1742
          %1745 = dma.vmem_to_hbm [thread:$0]  %s1741, 128, %s1743, %s1727
        $region136: #{tpu_custom_call.1} parent=99 // pred_fallthru
          _
      $region100: #{tpu_custom_call.1} parent=5 // pred_fallthru
        _
      %p1746 = scmp.le.s32.totalorder 2, %s37
      // Predicated region
      $region137: #{tpu_custom_call.1} parent=5 // pred_check
        %p1747 = pneg %p1746
      $region138: #{tpu_custom_call.1} parent=5 // pred_check_branch
        %1749 = sbr.rel (%p1747) target = $region140
      $region139: #{tpu_custom_call.1} parent=5 // pred_region
        %s1750 = ssub.s32 %s37, 2
        // Predicated region
        $region141: #{tpu_custom_call.1} parent=139 // pred_check
          %p1751 = pneg %p536
        $region142: #{tpu_custom_call.1} parent=139 // pred_check_branch
          %1753 = sbr.rel (%p1751) target = $region144
        $region143: #{tpu_custom_call.1} parent=139 // pred_region
          %s1754 = sand.u32 %s521, 1
          %s1755 = scalar_lea.sflag [#allocation6], %s1754
          %s1756 = sand.u32 %s521, 1
          %s1757 = smul.addr %s1756, 8
          %s1758 = scalar_lea.vmem [#allocation16], %s1757
          %1760 = dma.done %s1755, 128
        $region144: #{tpu_custom_call.1} parent=139 // pred_fallthru
          _
      $region140: #{tpu_custom_call.1} parent=5 // pred_fallthru
        _
    $region6: #{tpu_custom_call.1} parent=1 // loop_footer
      %s41 = sadd.s32 1, %s37
    $region7: #{tpu_custom_call.1} parent=1 // loop_footer_branch
      %36 = sbr.rel target = $region3
    $region8: #{tpu_custom_call.1} parent=1 // loop_exit
      _
    %1761 = vsyncpa [#allocation5], 1
    %s1762 = scalar_lea.sflag [#allocation5], 1
    %1763 = vsyncpa %s1762, 1
    %1764 = vsyncpa [#allocation8], 1
    %s1765 = scalar_lea.sflag [#allocation8], 1
    %1766 = vsyncpa %s1765, 1
    %1767 = vsyncpa [#allocation11], 1
    %1768 = vsyncpa [#allocation14], 1
    %1769 = vsyncpa [#allocation6], 1
    %s1770 = scalar_lea.sflag [#allocation6], 1
    %1771 = vsyncpa %s1770, 1

</llo_original>
